<compile_context>
chip_gen: v5e
topology: v5e:2x2
jax: 0.10.0
libtpu: 0.0.40
codegen_flags: <defaults>
</compile_context>

<pallas_src>
import jax
import jax.numpy as jnp
from jax.experimental import pallas as pl
from jax.experimental.pallas import tpu as pltpu


def _round_up(x, m):
    return (x + m - 1) // m * m


# ----------------------------------------------------------------------------
# fused BN + Mish epilogue (1 exp + 2 approx reciprocals per element)
# ----------------------------------------------------------------------------
def _bn_mish(acc, scale, shift):
    y = acc * scale + shift
    a = jnp.exp(-jnp.abs(y))                                   # EUP
    # q = exp(-softplus(y)) = 1 / (1 + e^y), computed stably for both signs.
    q = jnp.where(y >= 0, a, 1.0) * pl.reciprocal(1.0 + a, approx=True)
    q2 = q * q
    # tanh(softplus(y)) = (1 - q^2) / (1 + q^2)
    return y * (1.0 - q2) * pl.reciprocal(1.0 + q2, approx=True)


# ----------------------------------------------------------------------------
# kernels
# ----------------------------------------------------------------------------
def _cbm_kernel_single_k(a_ref, b_ref, scale_ref, shift_ref, o_ref):
    """K fits in one tile: matmul + BN + Mish + transposed store, no scratch."""
    acc = jnp.dot(a_ref[...], b_ref[...], preferred_element_type=jnp.float32)
    o_ref[...] = _bn_mish(acc, scale_ref[...], shift_ref[...]).T


def _cbm_kernel_multi_k(a_ref, b_ref, scale_ref, shift_ref, o_ref, acc_ref):
    """General K-tiled path with a resident f32 accumulator in VMEM scratch."""
    k = pl.program_id(3)
    partial = jnp.dot(a_ref[...], b_ref[...], preferred_element_type=jnp.float32)

    @pl.when(k == 0)
    def _():
        acc_ref[...] = partial

    @pl.when(k > 0)
    def _():
        acc_ref[...] += partial

    @pl.when(k == pl.num_programs(3) - 1)
    def _():
        o_ref[...] = _bn_mish(acc_ref[...], scale_ref[...], shift_ref[...]).T


# ----------------------------------------------------------------------------
# Parameter preprocessing (done ONCE, outside the forward path)
# ----------------------------------------------------------------------------
def prepare_cbm_params(w, b, gamma, beta, running_mean, running_var, eps, stride):
    """Fold BN + conv bias; repack weights to (kh,kw,cin)-minor, pad, bf16-cast."""
    cout, cin, kh, kw = w.shape
    K = cin * kh * kw

    # N tile first, then pad Cout up to it (lane-dense, unmasked output stores).
    if cout <= 128:
        tn = 128
    elif cout <= 256:
        tn = 256
    else:
        tn = 512
    Np = _round_up(cout, tn)

    # Single full-K step when it fits comfortably in VMEM; else 128-aligned tiles.
    if K <= 4096:
        tk, Kp = K, K
    else:
        tk = 2048
        Kp = _round_up(K, tk)

    # (Cout, Cin, KH, KW) -> (KH, KW, Cin, Cout) -> (K, Cout): matches im2col order.
    w_mat = w.transpose(2, 3, 1, 0).reshape(K, cout).astype(jnp.bfloat16)
    w_mat = jnp.pad(w_mat, ((0, Kp - K), (0, Np - cout)))

    s = gamma / jnp.sqrt(running_var + eps)            # per-channel BN scale
    t = beta - running_mean * s + b * s                # BN shift with conv bias folded
    scale = jnp.pad(s, (0, Np - cout)).reshape(1, Np).astype(jnp.float32)
    shift = jnp.pad(t, (0, Np - cout)).reshape(1, Np).astype(jnp.float32)

    return dict(w_mat=w_mat, scale=scale, shift=shift, cout=cout,
                K=K, Kp=Kp, tk=tk, tn=tn,
                kh=kh, kw=kw, stride=stride, pad=kh // 2)


# ----------------------------------------------------------------------------
# Layout-friendly im2col: bf16 NHWC shifted slices concatenated on channel axis
# ----------------------------------------------------------------------------
def _build_patches(x, kh, kw, stride, pad, Kp):
    """x: (N, C, H, W) f32 -> (N, OH*OW, Kp) bf16, K-minor order (kh, kw, c)."""
    n, c, h, w = x.shape
    K = c * kh * kw
    xh = x.astype(jnp.bfloat16).transpose(0, 2, 3, 1)          # NHWC, bf16
    xp = jnp.pad(xh, ((0, 0), (pad, pad), (pad, pad), (0, 0)))
    oh = (h + 2 * pad - kh) // stride + 1
    ow = (w + 2 * pad - kw) // stride + 1

    pieces = []
    for i in range(kh):
        for j in range(kw):
            pieces.append(xp[:, i:i + stride * oh:stride,
                              j:j + stride * ow:stride, :])
    if Kp > K:  # fold K padding into the same concatenate (no extra pass)
        pieces.append(jnp.zeros((n, oh, ow, Kp - K), jnp.bfloat16))
    a = jnp.concatenate(pieces, axis=-1)                       # (N, OH, OW, Kp)
    return a.reshape(n, oh * ow, Kp), oh, ow


# ----------------------------------------------------------------------------
# CBM forward: conv -> folded-BN -> Mish, output already NCHW
# ----------------------------------------------------------------------------
def cbm_forward(x, prep):
    n = x.shape[0]
    kh, kw, stride, pad = prep["kh"], prep["kw"], prep["stride"], prep["pad"]
    Kp, tk, tn = prep["Kp"], prep["tk"], prep["tn"]
    w_mat = prep["w_mat"]
    Np = w_mat.shape[1]
    cout = prep["cout"]

    a, oh, ow = _build_patches(x, kh, kw, stride, pad, Kp)     # (n, OH*OW, Kp)
    ohw = oh * ow

    # Spatial tile: multiple of 128 dividing the (padded) per-image pixel count.
    ohw_p = _round_up(ohw, 128)
    if ohw_p != ohw:
        a = jnp.pad(a, ((0, 0), (0, ohw_p - ohw), (0, 0)))
    tm = 128
    for cand in (512, 256):
        if ohw_p % cand == 0:
            tm = cand
            break
    # Keep >= 2 parallel programs so both v7x TensorCores stay busy.
    while tm > 128 and n * (ohw_p // tm) * (Np // tn) < 2:
        tm //= 2

    st = ohw_p // tm
    nt = Np // tn
    nk = Kp // tk

    if nk == 1:
        kernel = _cbm_kernel_single_k
        scratch = ()
    else:
        kernel = _cbm_kernel_multi_k
        scratch = (pltpu.VMEM((tm, tn), jnp.float32),)

    # Account for operand re-streaming across the grid (A per N-tile, W per M-tile).
    cost = pl.CostEstimate(
        flops=2 * n * ohw_p * Kp * Np,
        transcendentals=3 * n * ohw_p * Np,
        bytes_accessed=(n * ohw_p * Kp * 2) * nt
        + (Kp * Np * 2) * (n * st)
        + n * Np * ohw_p * 4,
    )

    out = pl.pallas_call(
        kernel,
        out_shape=jax.ShapeDtypeStruct((n, Np, ohw_p), jnp.float32),
        grid_spec=pltpu.PrefetchScalarGridSpec(
            num_scalar_prefetch=0,
            grid=(n, st, nt, nk),
            in_specs=[
                # A: (n, OH*OW_p, Kp) bf16 patches
                pl.BlockSpec((None, tm, tk), lambda b, s, j, k: (b, s, k)),
                # W: (Kp, Np) bf16
                pl.BlockSpec((tk, tn), lambda b, s, j, k: (k, j)),
                # folded BN scale / shift: (1, Np) f32
                pl.BlockSpec((1, tn), lambda b, s, j, k: (0, j)),
                pl.BlockSpec((1, tn), lambda b, s, j, k: (0, j)),
            ],
            # Output written transposed: (n, Cout_p, OH*OW_p)  -> NCHW for free.
            out_specs=pl.BlockSpec((None, tn, tm), lambda b, s, j, k: (b, j, s)),
            scratch_shapes=scratch,
        ),
        compiler_params=pltpu.CompilerParams(
            dimension_semantics=("parallel", "parallel", "parallel", "arbitrary"),
            vmem_limit_bytes=32 * 1024 * 1024,
        ),
        cost_estimate=cost,
    )(a, w_mat, prep["scale"], prep["shift"])

    if Np != cout or ohw_p != ohw:
        out = out[:, :cout, :ohw]
    return out.reshape(n, cout, oh, ow)                        # NCHW, no transpose


# ----------------------------------------------------------------------------
# Pure-JAX reference (f32) for correctness
# ----------------------------------------------------------------------------
def reference_forward(x, w, b, gamma, beta, running_mean, running_var, eps, stride):
    pad = w.shape[2] // 2
    y = jax.lax.conv_general_dilated(
        x, w, window_strides=(stride, stride),
        padding=[(pad, pad), (pad, pad)],
        dimension_numbers=("NCHW", "OIHW", "NCHW"))
    y = y + b.reshape(1, -1, 1, 1)
    inv = (gamma / jnp.sqrt(running_var + eps)).reshape(1, -1, 1, 1)
    y = (y - running_mean.reshape(1, -1, 1, 1)) * inv + beta.reshape(1, -1, 1, 1)
    return y * jnp.tanh(jax.nn.softplus(y))


# ----------------------------------------------------------------------------
# main
# ----------------------------------------------------------------------------
if __name__ == "__main__":
    key = jax.random.PRNGKey(0)
    kx, kw_, kb, kg, kbe, km, kv = jax.random.split(key, 7)

    # CBM(in_filters=64, out_filters=128, kernel_size=3, stride=1)
    batch, cin, hw = 2, 64, 16
    cout, ks, stride = 128, 3, 1
    eps = 1e-4

    x = jax.random.normal(kx, (batch, cin, hw, hw), jnp.float32)

    bound = 1.0 / jnp.sqrt(float(cin * ks * ks))
    w = jax.random.uniform(kw_, (cout, cin, ks, ks), jnp.float32, -bound, bound)
    b = jax.random.uniform(kb, (cout,), jnp.float32, -bound, bound)
    gamma = jax.random.uniform(kg, (cout,), jnp.float32, 0.8, 1.2)
    beta = jax.random.uniform(kbe, (cout,), jnp.float32, -0.1, 0.1)
    running_mean = jax.random.uniform(km, (cout,), jnp.float32, -0.2, 0.2)
    running_var = jax.random.uniform(kv, (cout,), jnp.float32, 0.5, 1.5)

    prep = prepare_cbm_params(w, b, gamma, beta, running_mean, running_var,
                              eps, stride)

    out = jax.block_until_ready(cbm_forward(x, prep))
    ref = jax.block_until_ready(
        reference_forward(x, w, b, gamma, beta, running_mean, running_var,
                          eps, stride))

    assert out.shape == ref.shape == (batch, cout, hw, hw), out.shape
    # bf16-streamed operands (f32 accumulation) + approx-reciprocal Mish
    # epilogue -> relaxed tolerance vs the exact f32 reference.
    max_err = float(jnp.max(jnp.abs(out - ref)))
    assert jnp.allclose(out, ref, atol=3e-2, rtol=3e-2), max_err

    print("KERNEL_OK")
</pallas_src>

<mosaic_0001>
module attributes {stable_mosaic.version = 11 : i64} {
  func.func @_cbm_kernel_single_k(%arg0: i32, %arg1: i32, %arg2: i32, %arg3: i32, %arg4: memref<1x256x576xbf16, #tpu.memory_space<vmem>>, %arg5: memref<576x128xbf16, #tpu.memory_space<vmem>>, %arg6: memref<1x128xf32, #tpu.memory_space<vmem>>, %arg7: memref<1x128xf32, #tpu.memory_space<vmem>>, %arg8: memref<1x128x256xf32, #tpu.memory_space<vmem>>) attributes {dimension_semantics = [#tpu.dimension_semantics<parallel>, #tpu.dimension_semantics<parallel>, #tpu.dimension_semantics<parallel>, #tpu.dimension_semantics<arbitrary>], iteration_bounds = array<i64: 2, 1, 1, 1>, scalar_prefetch = 0 : i64, scratch_operands = 0 : i64, tpu.core_type = #tpu.core_type<tc>, window_params = [{transform_indices = @transform_0, window_bounds = array<i64: 1, 256, 576>}, {transform_indices = @transform_1, window_bounds = array<i64: 576, 128>}, {transform_indices = @transform_2, window_bounds = array<i64: 1, 128>}, {transform_indices = @transform_3, window_bounds = array<i64: 1, 128>}, {transform_indices = @transform_4, window_bounds = array<i64: 1, 128, 256>}]} {
    %c0 = arith.constant 0 : index
    %c0_0 = arith.constant 0 : index
    %c0_1 = arith.constant 0 : index
    %0 = vector.load %arg4[%c0, %c0_0, %c0_1] : memref<1x256x576xbf16, #tpu.memory_space<vmem>>, vector<1x256x576xbf16>
    %1 = vector.shape_cast %0 : vector<1x256x576xbf16> to vector<256x576xbf16>
    %c0_2 = arith.constant 0 : index
    %c0_3 = arith.constant 0 : index
    %2 = vector.load %arg5[%c0_2, %c0_3] : memref<576x128xbf16, #tpu.memory_space<vmem>>, vector<576x128xbf16>
    %cst = arith.constant dense<0.000000e+00> : vector<256x128xf32>
    %3 = tpu.matmul %1, %2, %cst {dimension_numbers = #tpu.dot_dimension_numbers<[1], [0], [0], [1], [0, 0, 1, 1], [], []>} : vector<256x576xbf16>, vector<576x128xbf16>, vector<256x128xf32> -> vector<256x128xf32>
    %c0_4 = arith.constant 0 : index
    %c0_5 = arith.constant 0 : index
    %4 = vector.load %arg6[%c0_4, %c0_5] : memref<1x128xf32, #tpu.memory_space<vmem>>, vector<1x128xf32>
    %c0_6 = arith.constant 0 : index
    %c0_7 = arith.constant 0 : index
    %5 = vector.load %arg7[%c0_6, %c0_7] : memref<1x128xf32, #tpu.memory_space<vmem>>, vector<1x128xf32>
    %6 = vector.broadcast %4 : vector<1x128xf32> to vector<256x128xf32>
    %7 = arith.mulf %3, %6 : vector<256x128xf32>
    %8 = vector.broadcast %5 : vector<1x128xf32> to vector<256x128xf32>
    %9 = arith.addf %7, %8 : vector<256x128xf32>
    %10 = math.absf %9 : vector<256x128xf32>
    %cst_8 = arith.constant 0.000000e+00 : f32
    %11 = vector.broadcast %cst_8 : f32 to vector<256x128xf32>
    %12 = arith.subf %11, %10 : vector<256x128xf32>
    %13 = math.exp %12 : vector<256x128xf32>
    %cst_9 = arith.constant 0.000000e+00 : f32
    %14 = vector.broadcast %cst_9 : f32 to vector<256x128xf32>
    %15 = arith.cmpf oge, %9, %14 : vector<256x128xf32>
    %cst_10 = arith.constant 1.000000e+00 : f32
    %16 = vector.broadcast %cst_10 : f32 to vector<256x128xf32>
    %17 = arith.select %15, %13, %16 : vector<256x128xi1>, vector<256x128xf32>
    %cst_11 = arith.constant 1.000000e+00 : f32
    %18 = vector.broadcast %cst_11 : f32 to vector<256x128xf32>
    %19 = arith.addf %18, %13 : vector<256x128xf32>
    %20 = tpu.reciprocal %19 {approx = true} : vector<256x128xf32> -> vector<256x128xf32>
    %21 = arith.mulf %17, %20 : vector<256x128xf32>
    %22 = arith.mulf %21, %21 : vector<256x128xf32>
    %cst_12 = arith.constant 1.000000e+00 : f32
    %23 = vector.broadcast %cst_12 : f32 to vector<256x128xf32>
    %24 = arith.subf %23, %22 : vector<256x128xf32>
    %25 = arith.mulf %9, %24 : vector<256x128xf32>
    %cst_13 = arith.constant 1.000000e+00 : f32
    %26 = vector.broadcast %cst_13 : f32 to vector<256x128xf32>
    %27 = arith.addf %26, %22 : vector<256x128xf32>
    %28 = tpu.reciprocal %27 {approx = true} : vector<256x128xf32> -> vector<256x128xf32>
    %29 = arith.mulf %25, %28 : vector<256x128xf32>
    %30 = tpu.transpose %29, [1, 0] : vector<256x128xf32> -> vector<128x256xf32>
    %c0_14 = arith.constant 0 : index
    %c0_15 = arith.constant 0 : index
    %c0_16 = arith.constant 0 : index
    %31 = vector.load %arg8[%c0_14, %c0_15, %c0_16] : memref<1x128x256xf32, #tpu.memory_space<vmem>>, vector<1x128x256xf32>
    %32 = vector.shape_cast %31 : vector<1x128x256xf32> to vector<128x256xf32>
    %33 = vector.shape_cast %30 : vector<128x256xf32> to vector<1x128x256xf32>
    tpu.vector_store %arg8[%c0_14, %c0_15, %c0_16], %33 {strides = array<i32>} : memref<1x128x256xf32, #tpu.memory_space<vmem>>, vector<1x128x256xf32>,
    return
  }
  func.func @transform_0(%arg0: i32, %arg1: i32, %arg2: i32, %arg3: i32) -> (i32, i32, i32) {
    %c0_i32 = arith.constant 0 : i32
    return %arg0, %arg1, %arg3 : i32, i32, i32
  }
  func.func @transform_1(%arg0: i32, %arg1: i32, %arg2: i32, %arg3: i32) -> (i32, i32) {
    %c0_i32 = arith.constant 0 : i32
    return %arg3, %arg2 : i32, i32
  }
  func.func @transform_2(%arg0: i32, %arg1: i32, %arg2: i32, %arg3: i32) -> (i32, i32) {
    %c0_i32 = arith.constant 0 : i32
    %c0_i32_0 = arith.constant 0 : i32
    return %c0_i32, %arg2 : i32, i32
  }
  func.func @transform_3(%arg0: i32, %arg1: i32, %arg2: i32, %arg3: i32) -> (i32, i32) {
    %c0_i32 = arith.constant 0 : i32
    %c0_i32_0 = arith.constant 0 : i32
    return %c0_i32, %arg2 : i32, i32
  }
  func.func @transform_4(%arg0: i32, %arg1: i32, %arg2: i32, %arg3: i32) -> (i32, i32, i32) {
    %c0_i32 = arith.constant 0 : i32
    return %arg0, %arg2, %arg1 : i32, i32, i32
  }
}

</mosaic_0001>

<llo_original>
// kernel: tpu_custom_call.1
$region0: #{tpu_custom_call.1}
  #allocation0 [shape = 'u32[]', space=smem, size = 0x4, offset = 0x4, fixed_abs, tag = 'smem constant byte address 0x4 - core index']
  #allocation1 [shape = 'u32[72,128]{1,0:T(1,128)}', space=vmem, size = 0x9000, scoped, tag = 'internal scratch']
  %s0 = inlined_call_operand.vmem [shape: bf16[2,256,576], index: 0, kind: input, shape index: {}]
  %s1 = inlined_call_operand.vmem [shape: bf16[576,128], index: 1, kind: input, shape index: {}]
  %s2 = inlined_call_operand.vmem [shape: f32[1,128], index: 2, kind: input, shape index: {}]
  %s3 = inlined_call_operand.vmem [shape: f32[1,128], index: 3, kind: input, shape index: {}]
  %s4 = inlined_call_operand.hbm [shape: f32[2,128,256], index: 4, kind: output, shape index: {}]
  %s5 = sld [smem:[#allocation0]]
  $region49: #{tpu_custom_call.1} parent=0
    _
  %s7 = ssub.s32 1, %s5
  %s8 = scalar_select 0, %s7, %s5
  $region1: #{tpu_custom_call.1} parent=0
    #allocation2 [shape = 'u8[262144]{0}', space=vmem, size = 0x40000, scoped, tag = 'output window, operand 0']
    #allocation3 [shape = 's32[2]{0}', space=sflag, size = 0x8, scoped, tag = 'scoped memory for tpu_custom_call.1']
    %9 = vsyncpa [#allocation3], 0
    %s10 = scalar_lea.sflag [#allocation3], 1
    %11 = vsyncpa %s10, 0
    loop: start=0, step=1, limit=4
    $region2: #{tpu_custom_call.1} parent=1 // loop_pre_header
      _
    $region3: #{tpu_custom_call.1} parent=1 // loop_header
      %s13 = sphi 0, %s17
      %p14 = scmp.ge.s32.totalorder %s13, 4
      %s20 = sphi 0, %s46
      %s21 = sphi 0, %s42
      %s22 = sphi 0, %s38
      %s23 = sphi 0, %s34
      %s24 = sphi 0, %s20
      %s25 = sphi 0, %s21
      %s26 = sphi 0, %s22
      %s27 = sphi 0, %s23
      %s28 = sphi 0, %s24
      %s29 = sphi 0, %s25
      %s30 = sphi 0, %s26
      %s31 = sphi 0, %s27
      %s53 = sphi 0, %s55
      %s56 = sphi 0, %s53
      %s57 = sphi 0, %s56
      %s73 = sphi 0, %s57
      %s81 = sphi 0, %s83
      %s84 = sphi 0, %s81
      %s85 = sphi 0, %s84
      %s101 = sphi 0, %s85
      %s107 = sphi 0, %s109
      %s110 = sphi 0, %s107
      %s111 = sphi 0, %s110
      %s127 = sphi 0, %s111
      %s133 = sphi 0, %s135
      %s136 = sphi 0, %s133
      %s137 = sphi 0, %s136
      %s153 = sphi 0, %s137
      %s163 = sphi 0, %s165
      %s166 = sphi 0, %s163
      %s167 = sphi 0, %s166
      %s183 = sphi 0, %s167
    $region4: #{tpu_custom_call.1} parent=1 // loop_header_branch
      %16 = sbr.rel (%p14) target = $region8
    $region5: #{tpu_custom_call.1} parent=1 // loop_body
      %s18 = ssub.s32 %s13, 1
      %s19 = ssub.s32 %s13, 2
      %s32 = sadd.s32 1, %s23
      %p33 = scmp.ge.s32.totalorder %s32, 1
      %s34 = scalar_select %p33, 0, %s32
      %s35 = sadd.s32 1, %s22
      %s36 = scalar_select %p33, %s35, %s22
      %p37 = scmp.ge.s32.totalorder %s36, 1
      %s38 = scalar_select %p37, 0, %s36
      %s39 = sadd.s32 1, %s21
      %s40 = scalar_select %p37, %s39, %s21
      %p41 = scmp.ge.s32.totalorder %s40, 1
      %s42 = scalar_select %p41, 0, %s40
      %s43 = sadd.s32 1, %s20
      %s44 = scalar_select %p41, %s43, %s20
      %p45 = scmp.ge.s32.totalorder %s44, 2
      %s46 = scalar_select %p45, 0, %s44
      %s47 = ssub.s32 %s20, %s46
      %s48 = ssub.s32 %s21, %s42
      %s49 = sor.u32 %s47, %s48
      %s50 = ssub.s32 %s23, %s34
      %s51 = sor.u32 %s49, %s50
      %p52 = scmp.eq.s32.totalorder %s51, 0
      %s54 = sadd.s32 %s53, 1
      %s55 = scalar_select %p52, %s53, %s54
      %p58 = pneg %p52
      %p59 = scmp.eq.s32.totalorder %s13, 1
      %p60 = por %p58, %p59
      %p61 = scmp.ne.s32.totalorder %s53, %s56
      %p62 = scmp.eq.s32.totalorder %s13, 0
      %p63 = por %p61, %p62
      %p64 = scmp.ne.s32.totalorder %s53, %s56
      %p65 = scmp.eq.s32.totalorder %s18, 1
      %p66 = por %p64, %p65
      %p67 = scmp.ne.s32.totalorder %s56, %s57
      %p68 = scmp.eq.s32.totalorder %s18, 0
      %p69 = por %p67, %p68
      %p70 = scmp.ne.s32.totalorder %s56, %s57
      %p71 = scmp.eq.s32.totalorder %s19, 1
      %p72 = por %p70, %p71
      %p74 = scmp.ne.s32.totalorder %s57, %s73
      %p75 = scmp.eq.s32.totalorder %s19, 0
      %p76 = por %p74, %p75
      %s77 = ssub.s32 %s23, %s34
      %s78 = ssub.s32 %s22, %s38
      %s79 = sor.u32 %s77, %s78
      %p80 = scmp.eq.s32.totalorder %s79, 0
      %s82 = sadd.s32 %s81, 1
      %s83 = scalar_select %p80, %s81, %s82
      %p86 = pneg %p80
      %p87 = scmp.eq.s32.totalorder %s13, 1
      %p88 = por %p86, %p87
      %p89 = scmp.ne.s32.totalorder %s81, %s84
      %p90 = scmp.eq.s32.totalorder %s13, 0
      %p91 = por %p89, %p90
      %p92 = scmp.ne.s32.totalorder %s81, %s84
      %p93 = scmp.eq.s32.totalorder %s18, 1
      %p94 = por %p92, %p93
      %p95 = scmp.ne.s32.totalorder %s84, %s85
      %p96 = scmp.eq.s32.totalorder %s18, 0
      %p97 = por %p95, %p96
      %p98 = scmp.ne.s32.totalorder %s84, %s85
      %p99 = scmp.eq.s32.totalorder %s19, 1
      %p100 = por %p98, %p99
      %p102 = scmp.ne.s32.totalorder %s85, %s101
      %p103 = scmp.eq.s32.totalorder %s19, 0
      %p104 = por %p102, %p103
      %s105 = ssub.s32 %s22, %s38
      %p106 = scmp.eq.s32.totalorder %s105, 0
      %s108 = sadd.s32 %s107, 1
      %s109 = scalar_select %p106, %s107, %s108
      %p112 = pneg %p106
      %p113 = scmp.eq.s32.totalorder %s13, 1
      %p114 = por %p112, %p113
      %p115 = scmp.ne.s32.totalorder %s107, %s110
      %p116 = scmp.eq.s32.totalorder %s13, 0
      %p117 = por %p115, %p116
      %p118 = scmp.ne.s32.totalorder %s107, %s110
      %p119 = scmp.eq.s32.totalorder %s18, 1
      %p120 = por %p118, %p119
      %p121 = scmp.ne.s32.totalorder %s110, %s111
      %p122 = scmp.eq.s32.totalorder %s18, 0
      %p123 = por %p121, %p122
      %p124 = scmp.ne.s32.totalorder %s110, %s111
      %p125 = scmp.eq.s32.totalorder %s19, 1
      %p126 = por %p124, %p125
      %p128 = scmp.ne.s32.totalorder %s111, %s127
      %p129 = scmp.eq.s32.totalorder %s19, 0
      %p130 = por %p128, %p129
      %s131 = ssub.s32 %s22, %s38
      %p132 = scmp.eq.s32.totalorder %s131, 0
      %s134 = sadd.s32 %s133, 1
      %s135 = scalar_select %p132, %s133, %s134
      %p138 = pneg %p132
      %p139 = scmp.eq.s32.totalorder %s13, 1
      %p140 = por %p138, %p139
      %p141 = scmp.ne.s32.totalorder %s133, %s136
      %p142 = scmp.eq.s32.totalorder %s13, 0
      %p143 = por %p141, %p142
      %p144 = scmp.ne.s32.totalorder %s133, %s136
      %p145 = scmp.eq.s32.totalorder %s18, 1
      %p146 = por %p144, %p145
      %p147 = scmp.ne.s32.totalorder %s136, %s137
      %p148 = scmp.eq.s32.totalorder %s18, 0
      %p149 = por %p147, %p148
      %p150 = scmp.ne.s32.totalorder %s136, %s137
      %p151 = scmp.eq.s32.totalorder %s19, 1
      %p152 = por %p150, %p151
      %p154 = scmp.ne.s32.totalorder %s137, %s153
      %p155 = scmp.eq.s32.totalorder %s19, 0
      %p156 = por %p154, %p155
      %s157 = ssub.s32 %s20, %s46
      %s158 = ssub.s32 %s22, %s38
      %s159 = sor.u32 %s157, %s158
      %s160 = ssub.s32 %s21, %s42
      %s161 = sor.u32 %s159, %s160
      %p162 = scmp.eq.s32.totalorder %s161, 0
      %s164 = sadd.s32 %s163, 1
      %s165 = scalar_select %p162, %s163, %s164
      %p168 = pneg %p162
      %p169 = scmp.eq.s32.totalorder %s13, 1
      %p170 = por %p168, %p169
      %p171 = scmp.ne.s32.totalorder %s163, %s166
      %p172 = scmp.eq.s32.totalorder %s13, 0
      %p173 = por %p171, %p172
      %p174 = scmp.ne.s32.totalorder %s163, %s166
      %p175 = scmp.eq.s32.totalorder %s18, 1
      %p176 = por %p174, %p175
      %p177 = scmp.ne.s32.totalorder %s166, %s167
      %p178 = scmp.eq.s32.totalorder %s18, 0
      %p179 = por %p177, %p178
      %p180 = scmp.ne.s32.totalorder %s166, %s167
      %p181 = scmp.eq.s32.totalorder %s19, 1
      %p182 = por %p180, %p181
      %p184 = scmp.ne.s32.totalorder %s167, %s183
      %p185 = scmp.eq.s32.totalorder %s19, 0
      %p186 = por %p184, %p185
      %p187 = scmp.le.s32.totalorder 1, %s13
      %p188 = scmp.lt.s32.totalorder %s13, 3
      %p189 = pnand %p187, %p188
      %p190 = pneg %p189
      // Predicated region
      $region9: #{tpu_custom_call.1} parent=5 // pred_check
        _
      $region10: #{tpu_custom_call.1} parent=5 // pred_check_branch
        %192 = sbr.rel (%p189) target = $region12
      $region11: #{tpu_custom_call.1} parent=5 // pred_region
        %s193 = ssub.s32 %s13, 1
        // Predicated region
        $region13: #{tpu_custom_call.1} parent=11 // pred_check
          %p194 = pneg %p97
        $region14: #{tpu_custom_call.1} parent=11 // pred_check_branch
          %196 = sbr.rel (%p194) target = $region16
        $region15: #{tpu_custom_call.1} parent=11 // pred_region
          %s197 = smul.u32 72, %s27
          %p198 = scmp.lt.s32.totalorder %s197, 71
          %s199 = scalar_select %p198, %s197, 71
          %p200 = scmp.lt.s32.totalorder %s26, 0
          %s201 = scalar_select %p200, %s26, 0
          %s202 = sadd.s32 %s201, %s199
          %s203 = smul.addr %s202, 4
          %s204 = scalar_lea.vmem %s1, %s203
          %s205 = smul.u32 72, %s27
        $region16: #{tpu_custom_call.1} parent=11 // pred_fallthru
          _
        // Predicated region
        $region17: #{tpu_custom_call.1} parent=11 // pred_check
          %p206 = pneg %p123
        $region18: #{tpu_custom_call.1} parent=11 // pred_check_branch
          %208 = sbr.rel (%p206) target = $region20
        $region19: #{tpu_custom_call.1} parent=11 // pred_region
          %p209 = scmp.lt.s32.totalorder %s26, 0
          %s210 = scalar_select %p209, %s26, 0
          %s211 = scalar_lea.vmem %s2, %s210
        $region20: #{tpu_custom_call.1} parent=11 // pred_fallthru
          _
        // Predicated region
        $region21: #{tpu_custom_call.1} parent=11 // pred_check
          %p212 = pneg %p149
        $region22: #{tpu_custom_call.1} parent=11 // pred_check_branch
          %214 = sbr.rel (%p212) target = $region24
        $region23: #{tpu_custom_call.1} parent=11 // pred_region
          %p215 = scmp.lt.s32.totalorder %s26, 0
          %s216 = scalar_select %p215, %s26, 0
          %s217 = scalar_lea.vmem %s3, %s216
        $region24: #{tpu_custom_call.1} parent=11 // pred_fallthru
          _
      $region12: #{tpu_custom_call.1} parent=5 // pred_fallthru
        _
      %p218 = scmp.lt.s32.totalorder %s13, 2
      // Predicated region
      $region25: #{tpu_custom_call.1} parent=5 // pred_check
        %p219 = pneg %p218
      $region26: #{tpu_custom_call.1} parent=5 // pred_check_branch
        %221 = sbr.rel (%p219) target = $region28
      $region27: #{tpu_custom_call.1} parent=5 // pred_region
        // Predicated region
        $region29: #{tpu_custom_call.1} parent=27 // pred_check
          %p222 = pneg %p63
        $region30: #{tpu_custom_call.1} parent=27 // pred_check_branch
          %224 = sbr.rel (%p222) target = $region32
        $region31: #{tpu_custom_call.1} parent=27 // pred_region
          %s225 = smul.u32 32, %s21
          %s226 = smul.u32 5, %s23
          %p227 = scmp.lt.s32.totalorder %s20, 1
          %s228 = scalar_select %p227, %s20, 1
          %p229 = scmp.lt.s32.totalorder %s225, 31
          %s230 = scalar_select %p229, %s225, 31
          %p231 = scmp.lt.s32.totalorder %s226, 4
          %s232 = scalar_select %p231, %s226, 4
          %s233 = smul.addr %s230, 5
          %s234 = sadd.s32 %s232, %s233
          %s235 = smul.addr %s228, 160
          %s236 = sadd.s32 %s234, %s235
          %s237 = smul.addr %s236, 4
          %s238 = scalar_lea.vmem %s0, %s237
          %s239 = smul.u32 32, %s21
          %s240 = smul.u32 5, %s23
        $region32: #{tpu_custom_call.1} parent=27 // pred_fallthru
          _
      $region28: #{tpu_custom_call.1} parent=5 // pred_fallthru
        _
      %p241 = scmp.le.s32.totalorder 1, %s13
      %p242 = scmp.lt.s32.totalorder %s13, 3
      %p243 = pnand %p241, %p242
      %p244 = pneg %p243
      // Predicated region
      $region33: #{tpu_custom_call.1} parent=5 // pred_check
        _
      $region34: #{tpu_custom_call.1} parent=5 // pred_check_branch
        %246 = sbr.rel (%p243) target = $region36
      $region35: #{tpu_custom_call.1} parent=5 // pred_region
        %s247 = ssub.s32 %s13, 1
        %s248 = smul.u32 32, %s25
        %s249 = smul.u32 5, %s27
        %p250 = scmp.lt.s32.totalorder %s24, 1
        %s251 = scalar_select %p250, %s24, 1
        %p252 = scmp.lt.s32.totalorder %s248, 31
        %s253 = scalar_select %p252, %s248, 31
        %p254 = scmp.lt.s32.totalorder %s249, 4
        %s255 = scalar_select %p254, %s249, 4
        %s256 = smul.addr %s253, 5
        %s257 = sadd.s32 %s255, %s256
        %s258 = smul.addr %s251, 160
        %s259 = sadd.s32 %s257, %s258
        %s260 = smul.addr %s259, 4
        %s261 = scalar_lea.vmem %s0, %s260
        %p262 = pneg %p69
        %p263 = pneg %p66
        %s264 = smul.u32 72, %s27
        %p265 = scmp.lt.s32.totalorder %s264, 71
        %s266 = scalar_select %p265, %s264, 71
        %p267 = scmp.lt.s32.totalorder %s26, 0
        %s268 = scalar_select %p267, %s26, 0
        %s269 = sadd.s32 %s268, %s266
        %s270 = smul.addr %s269, 4
        %s271 = scalar_lea.vmem %s1, %s270
        %p272 = pneg %p97
        %p273 = pneg %p94
        %p274 = scmp.lt.s32.totalorder %s26, 0
        %s275 = scalar_select %p274, %s26, 0
        %s276 = scalar_lea.vmem %s2, %s275
        %p277 = pneg %p123
        %p278 = pneg %p120
        %p279 = scmp.lt.s32.totalorder %s26, 0
        %s280 = scalar_select %p279, %s26, 0
        %s281 = scalar_lea.vmem %s3, %s280
        %p282 = pneg %p149
        %p283 = pneg %p146
        %p284 = pneg %p179
        %p285 = pneg %p176
        %s286 = sand.u32 %s166, 1
        %s287 = scalar_lea.sflag [#allocation3], %s286
        %s288 = sand.u32 %s166, 1
        %s289 = smul.addr %s288, 256
        %s290 = scalar_lea.vmem [#allocation2], %s289
        %s291 = smul.u32 32, %s25
        %s292 = smul.u32 5, %s27
        %p293 = scmp.lt.s32.totalorder %s24, 1
        %s294 = scalar_select %p293, %s24, 1
        %p295 = scmp.lt.s32.totalorder %s291, 31
        %s296 = scalar_select %p295, %s291, 31
        %p297 = scmp.lt.s32.totalorder %s292, 4
        %s298 = scalar_select %p297, %s292, 4
        %s299 = smul.addr %s296, 5
        %s300 = sadd.s32 %s298, %s299
        %s301 = smul.addr %s294, 160
        %s302 = sadd.s32 %s300, %s301
        %s303 = smul.addr %s302, 4
        %s304 = scalar_lea.vmem %s0, %s303
        %s305 = smul.u32 32, %s25
        %s306 = smul.u32 5, %s27
        %s307 = smul.u32 72, %s27
        %p308 = scmp.lt.s32.totalorder %s307, 71
        %s309 = scalar_select %p308, %s307, 71
        %p310 = scmp.lt.s32.totalorder %s26, 0
        %s311 = scalar_select %p310, %s26, 0
        %s312 = sadd.s32 %s311, %s309
        %s313 = smul.addr %s312, 4
        %s314 = scalar_lea.vmem %s1, %s313
        %s315 = smul.u32 72, %s27
        %p316 = scmp.lt.s32.totalorder %s26, 0
        %s317 = scalar_select %p316, %s26, 0
        %s318 = scalar_lea.vmem %s2, %s317
        %p319 = scmp.lt.s32.totalorder %s26, 0
        %s320 = scalar_select %p319, %s26, 0
        %s321 = scalar_lea.vmem %s3, %s320
        %s322 = smul.u32 16, %s26
        %s323 = smul.u32 2, %s25
        %v325 = vld [vmem:[%s304] sm:$0xff]
        %v326 = vld [vmem:[%s304 + $0x8] sm:$0xff]
        %v327 = vld [vmem:[%s304 + $0x10] sm:$0xf]
        %v328 = vld [vmem:[%s304 + $0x14] sm:$0xff]
        %v329 = vld [vmem:[%s304 + $0x1c] sm:$0xff]
        %v330 = vld [vmem:[%s304 + $0x24] sm:$0xf]
        %v331 = vld [vmem:[%s304 + $0x28] sm:$0xff]
        %v332 = vld [vmem:[%s304 + $0x30] sm:$0xff]
        %v333 = vld [vmem:[%s304 + $0x38] sm:$0xf]
        %v334 = vld [vmem:[%s304 + $0x3c] sm:$0xff]
        %v335 = vld [vmem:[%s304 + $0x44] sm:$0xff]
        %v336 = vld [vmem:[%s304 + $0x4c] sm:$0xf]
        %v337 = vld [vmem:[%s304 + $0x50] sm:$0xff]
        %v338 = vld [vmem:[%s304 + $0x58] sm:$0xff]
        %v339 = vld [vmem:[%s304 + $0x60] sm:$0xf]
        %v340 = vld [vmem:[%s304 + $0x64] sm:$0xff]
        %v341 = vld [vmem:[%s304 + $0x6c] sm:$0xff]
        %v342 = vld [vmem:[%s304 + $0x74] sm:$0xf]
        %v343 = vld [vmem:[%s304 + $0x78] sm:$0xff]
        %v344 = vld [vmem:[%s304 + $0x80] sm:$0xff]
        %v345 = vld [vmem:[%s304 + $0x88] sm:$0xf]
        %v346 = vld [vmem:[%s304 + $0x8c] sm:$0xff]
        %v347 = vld [vmem:[%s304 + $0x94] sm:$0xff]
        %v348 = vld [vmem:[%s304 + $0x9c] sm:$0xf]
        %v349 = vld [vmem:[%s304 + $0xa0] sm:$0xff]
        %v350 = vld [vmem:[%s304 + $0xa8] sm:$0xff]
        %v351 = vld [vmem:[%s304 + $0xb0] sm:$0xf]
        %v352 = vld [vmem:[%s304 + $0xb4] sm:$0xff]
        %v353 = vld [vmem:[%s304 + $0xbc] sm:$0xff]
        %v354 = vld [vmem:[%s304 + $0xc4] sm:$0xf]
        %v355 = vld [vmem:[%s304 + $0xc8] sm:$0xff]
        %v356 = vld [vmem:[%s304 + $0xd0] sm:$0xff]
        %v357 = vld [vmem:[%s304 + $0xd8] sm:$0xf]
        %v358 = vld [vmem:[%s304 + $0xdc] sm:$0xff]
        %v359 = vld [vmem:[%s304 + $0xe4] sm:$0xff]
        %v360 = vld [vmem:[%s304 + $0xec] sm:$0xf]
        %v361 = vld [vmem:[%s304 + $0xf0] sm:$0xff]
        %v362 = vld [vmem:[%s304 + $0xf8] sm:$0xff]
        %v363 = vld [vmem:[%s304 + $0x100] sm:$0xf]
        %v364 = vld [vmem:[%s304 + $0x104] sm:$0xff]
        %v365 = vld [vmem:[%s304 + $0x10c] sm:$0xff]
        %v366 = vld [vmem:[%s304 + $0x114] sm:$0xf]
        %v367 = vld [vmem:[%s304 + $0x118] sm:$0xff]
        %v368 = vld [vmem:[%s304 + $0x120] sm:$0xff]
        %v369 = vld [vmem:[%s304 + $0x128] sm:$0xf]
        %v370 = vld [vmem:[%s304 + $0x12c] sm:$0xff]
        %v371 = vld [vmem:[%s304 + $0x134] sm:$0xff]
        %v372 = vld [vmem:[%s304 + $0x13c] sm:$0xf]
        %v373 = vld [vmem:[%s304 + $0x140] sm:$0xff]
        %v374 = vld [vmem:[%s304 + $0x148] sm:$0xff]
        %v375 = vld [vmem:[%s304 + $0x150] sm:$0xf]
        %v376 = vld [vmem:[%s304 + $0x154] sm:$0xff]
        %v377 = vld [vmem:[%s304 + $0x15c] sm:$0xff]
        %v378 = vld [vmem:[%s304 + $0x164] sm:$0xf]
        %v379 = vld [vmem:[%s304 + $0x168] sm:$0xff]
        %v380 = vld [vmem:[%s304 + $0x170] sm:$0xff]
        %v381 = vld [vmem:[%s304 + $0x178] sm:$0xf]
        %v382 = vld [vmem:[%s304 + $0x17c] sm:$0xff]
        %v383 = vld [vmem:[%s304 + $0x184] sm:$0xff]
        %v384 = vld [vmem:[%s304 + $0x18c] sm:$0xf]
        %v385 = vld [vmem:[%s304 + $0x190] sm:$0xff]
        %v386 = vld [vmem:[%s304 + $0x198] sm:$0xff]
        %v387 = vld [vmem:[%s304 + $0x1a0] sm:$0xf]
        %v388 = vld [vmem:[%s304 + $0x1a4] sm:$0xff]
        %v389 = vld [vmem:[%s304 + $0x1ac] sm:$0xff]
        %v390 = vld [vmem:[%s304 + $0x1b4] sm:$0xf]
        %v391 = vld [vmem:[%s304 + $0x1b8] sm:$0xff]
        %v392 = vld [vmem:[%s304 + $0x1c0] sm:$0xff]
        %v393 = vld [vmem:[%s304 + $0x1c8] sm:$0xf]
        %v394 = vld [vmem:[%s304 + $0x1cc] sm:$0xff]
        %v395 = vld [vmem:[%s304 + $0x1d4] sm:$0xff]
        %v396 = vld [vmem:[%s304 + $0x1dc] sm:$0xf]
        %v397 = vld [vmem:[%s304 + $0x1e0] sm:$0xff]
        %v398 = vld [vmem:[%s304 + $0x1e8] sm:$0xff]
        %v399 = vld [vmem:[%s304 + $0x1f0] sm:$0xf]
        %v400 = vld [vmem:[%s304 + $0x1f4] sm:$0xff]
        %v401 = vld [vmem:[%s304 + $0x1fc] sm:$0xff]
        %v402 = vld [vmem:[%s304 + $0x204] sm:$0xf]
        %v403 = vld [vmem:[%s304 + $0x208] sm:$0xff]
        %v404 = vld [vmem:[%s304 + $0x210] sm:$0xff]
        %v405 = vld [vmem:[%s304 + $0x218] sm:$0xf]
        %v406 = vld [vmem:[%s304 + $0x21c] sm:$0xff]
        %v407 = vld [vmem:[%s304 + $0x224] sm:$0xff]
        %v408 = vld [vmem:[%s304 + $0x22c] sm:$0xf]
        %v409 = vld [vmem:[%s304 + $0x230] sm:$0xff]
        %v410 = vld [vmem:[%s304 + $0x238] sm:$0xff]
        %v411 = vld [vmem:[%s304 + $0x240] sm:$0xf]
        %v412 = vld [vmem:[%s304 + $0x244] sm:$0xff]
        %v413 = vld [vmem:[%s304 + $0x24c] sm:$0xff]
        %v414 = vld [vmem:[%s304 + $0x254] sm:$0xf]
        %v415 = vld [vmem:[%s304 + $0x258] sm:$0xff]
        %v416 = vld [vmem:[%s304 + $0x260] sm:$0xff]
        %v417 = vld [vmem:[%s304 + $0x268] sm:$0xf]
        %v418 = vld [vmem:[%s304 + $0x26c] sm:$0xff]
        %v419 = vld [vmem:[%s304 + $0x274] sm:$0xff]
        %v420 = vld [vmem:[%s304 + $0x27c] sm:$0xf]
        %v421 = vld [vmem:[%s314] sm:$0xf]
        %v422 = vld [vmem:[%s314 + $0x4] sm:$0xf]
        %v423 = vld [vmem:[%s314 + $0x8] sm:$0xf]
        %v424 = vld [vmem:[%s314 + $0xc] sm:$0xf]
        %v425 = vld [vmem:[%s314 + $0x10] sm:$0xf]
        %v426 = vld [vmem:[%s314 + $0x14] sm:$0xf]
        %v427 = vld [vmem:[%s314 + $0x18] sm:$0xf]
        %v428 = vld [vmem:[%s314 + $0x1c] sm:$0xf]
        %v429 = vld [vmem:[%s314 + $0x20] sm:$0xf]
        %v430 = vld [vmem:[%s314 + $0x24] sm:$0xf]
        %v431 = vld [vmem:[%s314 + $0x28] sm:$0xf]
        %v432 = vld [vmem:[%s314 + $0x2c] sm:$0xf]
        %v433 = vld [vmem:[%s314 + $0x30] sm:$0xf]
        %v434 = vld [vmem:[%s314 + $0x34] sm:$0xf]
        %v435 = vld [vmem:[%s314 + $0x38] sm:$0xf]
        %v436 = vld [vmem:[%s314 + $0x3c] sm:$0xf]
        %v437 = vld [vmem:[%s314 + $0x40] sm:$0xf]
        %v438 = vld [vmem:[%s314 + $0x44] sm:$0xf]
        %v439 = vld [vmem:[%s314 + $0x48] sm:$0xf]
        %v440 = vld [vmem:[%s314 + $0x4c] sm:$0xf]
        %v441 = vld [vmem:[%s314 + $0x50] sm:$0xf]
        %v442 = vld [vmem:[%s314 + $0x54] sm:$0xf]
        %v443 = vld [vmem:[%s314 + $0x58] sm:$0xf]
        %v444 = vld [vmem:[%s314 + $0x5c] sm:$0xf]
        %v445 = vld [vmem:[%s314 + $0x60] sm:$0xf]
        %v446 = vld [vmem:[%s314 + $0x64] sm:$0xf]
        %v447 = vld [vmem:[%s314 + $0x68] sm:$0xf]
        %v448 = vld [vmem:[%s314 + $0x6c] sm:$0xf]
        %v449 = vld [vmem:[%s314 + $0x70] sm:$0xf]
        %v450 = vld [vmem:[%s314 + $0x74] sm:$0xf]
        %v451 = vld [vmem:[%s314 + $0x78] sm:$0xf]
        %v452 = vld [vmem:[%s314 + $0x7c] sm:$0xf]
        %v453 = vld [vmem:[%s314 + $0x80] sm:$0xf]
        %v454 = vld [vmem:[%s314 + $0x84] sm:$0xf]
        %v455 = vld [vmem:[%s314 + $0x88] sm:$0xf]
        %v456 = vld [vmem:[%s314 + $0x8c] sm:$0xf]
        %v457 = vld [vmem:[%s314 + $0x90] sm:$0xf]
        %v458 = vld [vmem:[%s314 + $0x94] sm:$0xf]
        %v459 = vld [vmem:[%s314 + $0x98] sm:$0xf]
        %v460 = vld [vmem:[%s314 + $0x9c] sm:$0xf]
        %v461 = vld [vmem:[%s314 + $0xa0] sm:$0xf]
        %v462 = vld [vmem:[%s314 + $0xa4] sm:$0xf]
        %v463 = vld [vmem:[%s314 + $0xa8] sm:$0xf]
        %v464 = vld [vmem:[%s314 + $0xac] sm:$0xf]
        %v465 = vld [vmem:[%s314 + $0xb0] sm:$0xf]
        %v466 = vld [vmem:[%s314 + $0xb4] sm:$0xf]
        %v467 = vld [vmem:[%s314 + $0xb8] sm:$0xf]
        %v468 = vld [vmem:[%s314 + $0xbc] sm:$0xf]
        %v469 = vld [vmem:[%s314 + $0xc0] sm:$0xf]
        %v470 = vld [vmem:[%s314 + $0xc4] sm:$0xf]
        %v471 = vld [vmem:[%s314 + $0xc8] sm:$0xf]
        %v472 = vld [vmem:[%s314 + $0xcc] sm:$0xf]
        %v473 = vld [vmem:[%s314 + $0xd0] sm:$0xf]
        %v474 = vld [vmem:[%s314 + $0xd4] sm:$0xf]
        %v475 = vld [vmem:[%s314 + $0xd8] sm:$0xf]
        %v476 = vld [vmem:[%s314 + $0xdc] sm:$0xf]
        %v477 = vld [vmem:[%s314 + $0xe0] sm:$0xf]
        %v478 = vld [vmem:[%s314 + $0xe4] sm:$0xf]
        %v479 = vld [vmem:[%s314 + $0xe8] sm:$0xf]
        %v480 = vld [vmem:[%s314 + $0xec] sm:$0xf]
        %v481 = vld [vmem:[%s314 + $0xf0] sm:$0xf]
        %v482 = vld [vmem:[%s314 + $0xf4] sm:$0xf]
        %v483 = vld [vmem:[%s314 + $0xf8] sm:$0xf]
        %v484 = vld [vmem:[%s314 + $0xfc] sm:$0xf]
        %v485 = vld [vmem:[%s314 + $0x100] sm:$0xf]
        %v486 = vld [vmem:[%s314 + $0x104] sm:$0xf]
        %v487 = vld [vmem:[%s314 + $0x108] sm:$0xf]
        %v488 = vld [vmem:[%s314 + $0x10c] sm:$0xf]
        %v489 = vld [vmem:[%s314 + $0x110] sm:$0xf]
        %v490 = vld [vmem:[%s314 + $0x114] sm:$0xf]
        %v491 = vld [vmem:[%s314 + $0x118] sm:$0xf]
        %v492 = vld [vmem:[%s314 + $0x11c] sm:$0xf]
        %v589 = vunpack.c.l.b16 %v325
        %v590 = vunpack.c.h.b16 %v325
        %v591 = vunpack.c.l.b16 %v326
        %v592 = vunpack.c.h.b16 %v326
        %v593 = vunpack.c.l.b16 %v327
        %v594 = vunpack.c.l.b16 %v328
        %v595 = vunpack.c.h.b16 %v328
        %v596 = vunpack.c.l.b16 %v329
        %v597 = vunpack.c.h.b16 %v329
        %v598 = vunpack.c.l.b16 %v330
        %v599 = vunpack.c.l.b16 %v331
        %v600 = vunpack.c.h.b16 %v331
        %v601 = vunpack.c.l.b16 %v332
        %v602 = vunpack.c.h.b16 %v332
        %v603 = vunpack.c.l.b16 %v333
        %v604 = vunpack.c.l.b16 %v334
        %v605 = vunpack.c.h.b16 %v334
        %v606 = vunpack.c.l.b16 %v335
        %v607 = vunpack.c.h.b16 %v335
        %v608 = vunpack.c.l.b16 %v336
        %v609 = vunpack.c.l.b16 %v337
        %v610 = vunpack.c.h.b16 %v337
        %v611 = vunpack.c.l.b16 %v338
        %v612 = vunpack.c.h.b16 %v338
        %v613 = vunpack.c.l.b16 %v339
        %v614 = vunpack.c.l.b16 %v340
        %v615 = vunpack.c.h.b16 %v340
        %v616 = vunpack.c.l.b16 %v341
        %v617 = vunpack.c.h.b16 %v341
        %v618 = vunpack.c.l.b16 %v342
        %v619 = vunpack.c.l.b16 %v343
        %v620 = vunpack.c.h.b16 %v343
        %v621 = vunpack.c.l.b16 %v344
        %v622 = vunpack.c.h.b16 %v344
        %v623 = vunpack.c.l.b16 %v345
        %v624 = vunpack.c.l.b16 %v346
        %v625 = vunpack.c.h.b16 %v346
        %v626 = vunpack.c.l.b16 %v347
        %v627 = vunpack.c.h.b16 %v347
        %v628 = vunpack.c.l.b16 %v348
        %v629 = vunpack.c.l.b16 %v349
        %v630 = vunpack.c.h.b16 %v349
        %v631 = vunpack.c.l.b16 %v350
        %v632 = vunpack.c.h.b16 %v350
        %v633 = vunpack.c.l.b16 %v351
        %v634 = vunpack.c.l.b16 %v352
        %v635 = vunpack.c.h.b16 %v352
        %v636 = vunpack.c.l.b16 %v353
        %v637 = vunpack.c.h.b16 %v353
        %v638 = vunpack.c.l.b16 %v354
        %v639 = vunpack.c.l.b16 %v355
        %v640 = vunpack.c.h.b16 %v355
        %v641 = vunpack.c.l.b16 %v356
        %v642 = vunpack.c.h.b16 %v356
        %v643 = vunpack.c.l.b16 %v357
        %v644 = vunpack.c.l.b16 %v358
        %v645 = vunpack.c.h.b16 %v358
        %v646 = vunpack.c.l.b16 %v359
        %v647 = vunpack.c.h.b16 %v359
        %v648 = vunpack.c.l.b16 %v360
        %v649 = vunpack.c.l.b16 %v361
        %v650 = vunpack.c.h.b16 %v361
        %v651 = vunpack.c.l.b16 %v362
        %v652 = vunpack.c.h.b16 %v362
        %v653 = vunpack.c.l.b16 %v363
        %v654 = vunpack.c.l.b16 %v364
        %v655 = vunpack.c.h.b16 %v364
        %v656 = vunpack.c.l.b16 %v365
        %v657 = vunpack.c.h.b16 %v365
        %v658 = vunpack.c.l.b16 %v366
        %v659 = vunpack.c.l.b16 %v367
        %v660 = vunpack.c.h.b16 %v367
        %v661 = vunpack.c.l.b16 %v368
        %v662 = vunpack.c.h.b16 %v368
        %v663 = vunpack.c.l.b16 %v369
        %v664 = vunpack.c.l.b16 %v370
        %v665 = vunpack.c.h.b16 %v370
        %v666 = vunpack.c.l.b16 %v371
        %v667 = vunpack.c.h.b16 %v371
        %v668 = vunpack.c.l.b16 %v372
        %v669 = vunpack.c.l.b16 %v373
        %v670 = vunpack.c.h.b16 %v373
        %v671 = vunpack.c.l.b16 %v374
        %v672 = vunpack.c.h.b16 %v374
        %v673 = vunpack.c.l.b16 %v375
        %v674 = vunpack.c.l.b16 %v376
        %v675 = vunpack.c.h.b16 %v376
        %v676 = vunpack.c.l.b16 %v377
        %v677 = vunpack.c.h.b16 %v377
        %v678 = vunpack.c.l.b16 %v378
        %v679 = vunpack.c.l.b16 %v379
        %v680 = vunpack.c.h.b16 %v379
        %v681 = vunpack.c.l.b16 %v380
        %v682 = vunpack.c.h.b16 %v380
        %v683 = vunpack.c.l.b16 %v381
        %v684 = vunpack.c.l.b16 %v382
        %v685 = vunpack.c.h.b16 %v382
        %v686 = vunpack.c.l.b16 %v383
        %v687 = vunpack.c.h.b16 %v383
        %v688 = vunpack.c.l.b16 %v384
        %v689 = vunpack.c.l.b16 %v385
        %v690 = vunpack.c.h.b16 %v385
        %v691 = vunpack.c.l.b16 %v386
        %v692 = vunpack.c.h.b16 %v386
        %v693 = vunpack.c.l.b16 %v387
        %v694 = vunpack.c.l.b16 %v388
        %v695 = vunpack.c.h.b16 %v388
        %v696 = vunpack.c.l.b16 %v389
        %v697 = vunpack.c.h.b16 %v389
        %v698 = vunpack.c.l.b16 %v390
        %v699 = vunpack.c.l.b16 %v391
        %v700 = vunpack.c.h.b16 %v391
        %v701 = vunpack.c.l.b16 %v392
        %v702 = vunpack.c.h.b16 %v392
        %v703 = vunpack.c.l.b16 %v393
        %v704 = vunpack.c.l.b16 %v394
        %v705 = vunpack.c.h.b16 %v394
        %v706 = vunpack.c.l.b16 %v395
        %v707 = vunpack.c.h.b16 %v395
        %v708 = vunpack.c.l.b16 %v396
        %v709 = vunpack.c.l.b16 %v397
        %v710 = vunpack.c.h.b16 %v397
        %v711 = vunpack.c.l.b16 %v398
        %v712 = vunpack.c.h.b16 %v398
        %v713 = vunpack.c.l.b16 %v399
        %v714 = vunpack.c.l.b16 %v400
        %v715 = vunpack.c.h.b16 %v400
        %v716 = vunpack.c.l.b16 %v401
        %v717 = vunpack.c.h.b16 %v401
        %v718 = vunpack.c.l.b16 %v402
        %v719 = vunpack.c.l.b16 %v403
        %v720 = vunpack.c.h.b16 %v403
        %v721 = vunpack.c.l.b16 %v404
        %v722 = vunpack.c.h.b16 %v404
        %v723 = vunpack.c.l.b16 %v405
        %v724 = vunpack.c.l.b16 %v406
        %v725 = vunpack.c.h.b16 %v406
        %v726 = vunpack.c.l.b16 %v407
        %v727 = vunpack.c.h.b16 %v407
        %v728 = vunpack.c.l.b16 %v408
        %v729 = vunpack.c.l.b16 %v409
        %v730 = vunpack.c.h.b16 %v409
        %v731 = vunpack.c.l.b16 %v410
        %v732 = vunpack.c.h.b16 %v410
        %v733 = vunpack.c.l.b16 %v411
        %v734 = vunpack.c.l.b16 %v412
        %v735 = vunpack.c.h.b16 %v412
        %v736 = vunpack.c.l.b16 %v413
        %v737 = vunpack.c.h.b16 %v413
        %v738 = vunpack.c.l.b16 %v414
        %v739 = vunpack.c.l.b16 %v415
        %v740 = vunpack.c.h.b16 %v415
        %v741 = vunpack.c.l.b16 %v416
        %v742 = vunpack.c.h.b16 %v416
        %v743 = vunpack.c.l.b16 %v417
        %v744 = vunpack.c.l.b16 %v418
        %v745 = vunpack.c.h.b16 %v418
        %v746 = vunpack.c.l.b16 %v419
        %v747 = vunpack.c.h.b16 %v419
        %v748 = vunpack.c.l.b16 %v420
        %v749 = vpack.c.b16 %v594, %v589
        %v750 = vpack.c.b16 %v595, %v590
        %v751 = vpack.c.b16 %v596, %v591
        %v752 = vpack.c.b16 %v597, %v592
        %v753 = vpack.c.b16 %v598, %v593
        %v754 = vpack.c.b16 %v604, %v599
        %v755 = vpack.c.b16 %v605, %v600
        %v756 = vpack.c.b16 %v606, %v601
        %v757 = vpack.c.b16 %v607, %v602
        %v758 = vpack.c.b16 %v608, %v603
        %v759 = vpack.c.b16 %v614, %v609
        %v760 = vpack.c.b16 %v615, %v610
        %v761 = vpack.c.b16 %v616, %v611
        %v762 = vpack.c.b16 %v617, %v612
        %v763 = vpack.c.b16 %v618, %v613
        %v764 = vpack.c.b16 %v624, %v619
        %v765 = vpack.c.b16 %v625, %v620
        %v766 = vpack.c.b16 %v626, %v621
        %v767 = vpack.c.b16 %v627, %v622
        %v768 = vpack.c.b16 %v628, %v623
        %v769 = vpack.c.b16 %v634, %v629
        %v770 = vpack.c.b16 %v635, %v630
        %v771 = vpack.c.b16 %v636, %v631
        %v772 = vpack.c.b16 %v637, %v632
        %v773 = vpack.c.b16 %v638, %v633
        %v774 = vpack.c.b16 %v644, %v639
        %v775 = vpack.c.b16 %v645, %v640
        %v776 = vpack.c.b16 %v646, %v641
        %v777 = vpack.c.b16 %v647, %v642
        %v778 = vpack.c.b16 %v648, %v643
        %v779 = vpack.c.b16 %v654, %v649
        %v780 = vpack.c.b16 %v655, %v650
        %v781 = vpack.c.b16 %v656, %v651
        %v782 = vpack.c.b16 %v657, %v652
        %v783 = vpack.c.b16 %v658, %v653
        %v784 = vpack.c.b16 %v664, %v659
        %v785 = vpack.c.b16 %v665, %v660
        %v786 = vpack.c.b16 %v666, %v661
        %v787 = vpack.c.b16 %v667, %v662
        %v788 = vpack.c.b16 %v668, %v663
        %v789 = vpack.c.b16 %v674, %v669
        %v790 = vpack.c.b16 %v675, %v670
        %v791 = vpack.c.b16 %v676, %v671
        %v792 = vpack.c.b16 %v677, %v672
        %v793 = vpack.c.b16 %v678, %v673
        %v794 = vpack.c.b16 %v684, %v679
        %v795 = vpack.c.b16 %v685, %v680
        %v796 = vpack.c.b16 %v686, %v681
        %v797 = vpack.c.b16 %v687, %v682
        %v798 = vpack.c.b16 %v688, %v683
        %v799 = vpack.c.b16 %v694, %v689
        %v800 = vpack.c.b16 %v695, %v690
        %v801 = vpack.c.b16 %v696, %v691
        %v802 = vpack.c.b16 %v697, %v692
        %v803 = vpack.c.b16 %v698, %v693
        %v804 = vpack.c.b16 %v704, %v699
        %v805 = vpack.c.b16 %v705, %v700
        %v806 = vpack.c.b16 %v706, %v701
        %v807 = vpack.c.b16 %v707, %v702
        %v808 = vpack.c.b16 %v708, %v703
        %v809 = vpack.c.b16 %v714, %v709
        %v810 = vpack.c.b16 %v715, %v710
        %v811 = vpack.c.b16 %v716, %v711
        %v812 = vpack.c.b16 %v717, %v712
        %v813 = vpack.c.b16 %v718, %v713
        %v814 = vpack.c.b16 %v724, %v719
        %v815 = vpack.c.b16 %v725, %v720
        %v816 = vpack.c.b16 %v726, %v721
        %v817 = vpack.c.b16 %v727, %v722
        %v818 = vpack.c.b16 %v728, %v723
        %v819 = vpack.c.b16 %v734, %v729
        %v820 = vpack.c.b16 %v735, %v730
        %v821 = vpack.c.b16 %v736, %v731
        %v822 = vpack.c.b16 %v737, %v732
        %v823 = vpack.c.b16 %v738, %v733
        %v824 = vpack.c.b16 %v744, %v739
        %v825 = vpack.c.b16 %v745, %v740
        %v826 = vpack.c.b16 %v746, %v741
        %v827 = vpack.c.b16 %v747, %v742
        %v828 = vpack.c.b16 %v748, %v743
        %v965 = vunpack.c.l.b16 %v421
        %v966 = vunpack.c.l.b16 %v422
        %v967 = vunpack.c.l.b16 %v423
        %v968 = vunpack.c.l.b16 %v424
        %v969 = vunpack.c.l.b16 %v425
        %v970 = vunpack.c.l.b16 %v426
        %v971 = vunpack.c.l.b16 %v427
        %v972 = vunpack.c.l.b16 %v428
        %v973 = vunpack.c.l.b16 %v429
        %v974 = vunpack.c.l.b16 %v430
        %v975 = vunpack.c.l.b16 %v431
        %v976 = vunpack.c.l.b16 %v432
        %v977 = vunpack.c.l.b16 %v433
        %v978 = vunpack.c.l.b16 %v434
        %v979 = vunpack.c.l.b16 %v435
        %v980 = vunpack.c.l.b16 %v436
        %v981 = vunpack.c.l.b16 %v437
        %v982 = vunpack.c.l.b16 %v438
        %v983 = vunpack.c.l.b16 %v439
        %v984 = vunpack.c.l.b16 %v440
        %v985 = vunpack.c.l.b16 %v441
        %v986 = vunpack.c.l.b16 %v442
        %v987 = vunpack.c.l.b16 %v443
        %v988 = vunpack.c.l.b16 %v444
        %v989 = vunpack.c.l.b16 %v445
        %v990 = vunpack.c.l.b16 %v446
        %v991 = vunpack.c.l.b16 %v447
        %v992 = vunpack.c.l.b16 %v448
        %v993 = vunpack.c.l.b16 %v449
        %v994 = vunpack.c.l.b16 %v450
        %v995 = vunpack.c.l.b16 %v451
        %v996 = vunpack.c.l.b16 %v452
        %v997 = vunpack.c.l.b16 %v453
        %v998 = vunpack.c.l.b16 %v454
        %v999 = vunpack.c.l.b16 %v455
        %v1000 = vunpack.c.l.b16 %v456
        %v1001 = vunpack.c.l.b16 %v457
        %v1002 = vunpack.c.l.b16 %v458
        %v1003 = vunpack.c.l.b16 %v459
        %v1004 = vunpack.c.l.b16 %v460
        %v1005 = vunpack.c.l.b16 %v461
        %v1006 = vunpack.c.l.b16 %v462
        %v1007 = vunpack.c.l.b16 %v463
        %v1008 = vunpack.c.l.b16 %v464
        %v1009 = vunpack.c.l.b16 %v465
        %v1010 = vunpack.c.l.b16 %v466
        %v1011 = vunpack.c.l.b16 %v467
        %v1012 = vunpack.c.l.b16 %v468
        %v1013 = vunpack.c.l.b16 %v469
        %v1014 = vunpack.c.l.b16 %v470
        %v1015 = vunpack.c.l.b16 %v471
        %v1016 = vunpack.c.l.b16 %v472
        %v1017 = vunpack.c.l.b16 %v473
        %v1018 = vunpack.c.l.b16 %v474
        %v1019 = vunpack.c.l.b16 %v475
        %v1020 = vunpack.c.l.b16 %v476
        %v1021 = vunpack.c.l.b16 %v477
        %v1022 = vunpack.c.l.b16 %v478
        %v1023 = vunpack.c.l.b16 %v479
        %v1024 = vunpack.c.l.b16 %v480
        %v1025 = vunpack.c.l.b16 %v481
        %v1026 = vunpack.c.l.b16 %v482
        %v1027 = vunpack.c.l.b16 %v483
        %v1028 = vunpack.c.l.b16 %v484
        %v1029 = vunpack.c.l.b16 %v485
        %v1030 = vunpack.c.l.b16 %v486
        %v1031 = vunpack.c.l.b16 %v487
        %v1032 = vunpack.c.l.b16 %v488
        %v1033 = vunpack.c.l.b16 %v489
        %v1034 = vunpack.c.l.b16 %v490
        %v1035 = vunpack.c.l.b16 %v491
        %v1036 = vunpack.c.l.b16 %v492
        %v1037 = vpack.c.b16 %v966, %v965
        %v1038 = vpack.c.b16 %v968, %v967
        %v1039 = vpack.c.b16 %v970, %v969
        %v1040 = vpack.c.b16 %v972, %v971
        %v1041 = vpack.c.b16 %v974, %v973
        %v1042 = vpack.c.b16 %v976, %v975
        %v1043 = vpack.c.b16 %v978, %v977
        %v1044 = vpack.c.b16 %v980, %v979
        %v1045 = vpack.c.b16 %v982, %v981
        %v1046 = vpack.c.b16 %v984, %v983
        %v1047 = vpack.c.b16 %v986, %v985
        %v1048 = vpack.c.b16 %v988, %v987
        %v1049 = vpack.c.b16 %v990, %v989
        %v1050 = vpack.c.b16 %v992, %v991
        %v1051 = vpack.c.b16 %v994, %v993
        %v1052 = vpack.c.b16 %v996, %v995
        %v1053 = vpack.c.b16 %v998, %v997
        %v1054 = vpack.c.b16 %v1000, %v999
        %v1055 = vpack.c.b16 %v1002, %v1001
        %v1056 = vpack.c.b16 %v1004, %v1003
        %v1057 = vpack.c.b16 %v1006, %v1005
        %v1058 = vpack.c.b16 %v1008, %v1007
        %v1059 = vpack.c.b16 %v1010, %v1009
        %v1060 = vpack.c.b16 %v1012, %v1011
        %v1061 = vpack.c.b16 %v1014, %v1013
        %v1062 = vpack.c.b16 %v1016, %v1015
        %v1063 = vpack.c.b16 %v1018, %v1017
        %v1064 = vpack.c.b16 %v1020, %v1019
        %v1065 = vpack.c.b16 %v1022, %v1021
        %v1066 = vpack.c.b16 %v1024, %v1023
        %v1067 = vpack.c.b16 %v1026, %v1025
        %v1068 = vpack.c.b16 %v1028, %v1027
        %v1069 = vpack.c.b16 %v1030, %v1029
        %v1070 = vpack.c.b16 %v1032, %v1031
        %v1071 = vpack.c.b16 %v1034, %v1033
        %v1072 = vpack.c.b16 %v1036, %v1035
        %vm1109 = vcmask 523264
        %v1111 = vsel %vm1109, %v753, 0
        %v1114 = vsel %vm1109, %v758, 0
        %v1117 = vsel %vm1109, %v763, 0
        %v1120 = vsel %vm1109, %v768, 0
        %v1123 = vsel %vm1109, %v773, 0
        %v1126 = vsel %vm1109, %v778, 0
        %v1129 = vsel %vm1109, %v783, 0
        %v1132 = vsel %vm1109, %v788, 0
        %v1135 = vsel %vm1109, %v793, 0
        %v1138 = vsel %vm1109, %v798, 0
        %v1141 = vsel %vm1109, %v803, 0
        %v1144 = vsel %vm1109, %v808, 0
        %v1147 = vsel %vm1109, %v813, 0
        %v1150 = vsel %vm1109, %v818, 0
        %v1153 = vsel %vm1109, %v823, 0
        %v1156 = vsel %vm1109, %v828, 0
        %1158 = vmatpush.bf16.msra.mxu0 %v1044
        %1159 = vmatpush.bf16.msra.mxu0 %v1043
        %1160 = vmatpush.bf16.msra.mxu0 %v1042
        %1161 = vmatpush.bf16.msra.mxu0 %v1041
        %1162 = vmatpush.bf16.msra.mxu0 %v1040
        %1163 = vmatpush.bf16.msra.mxu0 %v1039
        %1164 = vmatpush.bf16.msra.mxu0 %v1038
        %1165 = vmatpush.bf16.msra.mxu0 %v1037
        %1166 = vmatmul.bf16.gmra.mxu0 %v749
        %v1167 = vpop.f32.mrf.mxu0
        %v1168 = vadd.f32 0.0, %v1167
        %v1169 = vpop.f32.mrf.mxu0
        %v1170 = vadd.f32 0.0, %v1169
        %1171 = vmatmul.bf16.gmra.mxu0 %v754
        %v1172 = vpop.f32.mrf.mxu0
        %v1173 = vadd.f32 0.0, %v1172
        %v1174 = vpop.f32.mrf.mxu0
        %v1175 = vadd.f32 0.0, %v1174
        %1176 = vmatmul.bf16.gmra.mxu0 %v759
        %v1177 = vpop.f32.mrf.mxu0
        %v1178 = vadd.f32 0.0, %v1177
        %v1179 = vpop.f32.mrf.mxu0
        %v1180 = vadd.f32 0.0, %v1179
        %1181 = vmatmul.bf16.gmra.mxu0 %v764
        %v1182 = vpop.f32.mrf.mxu0
        %v1183 = vadd.f32 0.0, %v1182
        %v1184 = vpop.f32.mrf.mxu0
        %v1185 = vadd.f32 0.0, %v1184
        %1186 = vmatmul.bf16.gmra.mxu0 %v769
        %v1187 = vpop.f32.mrf.mxu0
        %v1188 = vadd.f32 0.0, %v1187
        %v1189 = vpop.f32.mrf.mxu0
        %v1190 = vadd.f32 0.0, %v1189
        %1191 = vmatmul.bf16.gmra.mxu0 %v774
        %v1192 = vpop.f32.mrf.mxu0
        %v1193 = vadd.f32 0.0, %v1192
        %v1194 = vpop.f32.mrf.mxu0
        %v1195 = vadd.f32 0.0, %v1194
        %1196 = vmatmul.bf16.gmra.mxu0 %v779
        %v1197 = vpop.f32.mrf.mxu0
        %v1198 = vadd.f32 0.0, %v1197
        %v1199 = vpop.f32.mrf.mxu0
        %v1200 = vadd.f32 0.0, %v1199
        %1201 = vmatmul.bf16.gmra.mxu0 %v784
        %v1202 = vpop.f32.mrf.mxu0
        %v1203 = vadd.f32 0.0, %v1202
        %v1204 = vpop.f32.mrf.mxu0
        %v1205 = vadd.f32 0.0, %v1204
        %1206 = vmatmul.bf16.gmra.mxu0 %v789
        %v1207 = vpop.f32.mrf.mxu0
        %v1208 = vadd.f32 0.0, %v1207
        %v1209 = vpop.f32.mrf.mxu0
        %v1210 = vadd.f32 0.0, %v1209
        %1211 = vmatmul.bf16.gmra.mxu0 %v794
        %v1212 = vpop.f32.mrf.mxu0
        %v1213 = vadd.f32 0.0, %v1212
        %v1214 = vpop.f32.mrf.mxu0
        %v1215 = vadd.f32 0.0, %v1214
        %1216 = vmatmul.bf16.gmra.mxu0 %v799
        %v1217 = vpop.f32.mrf.mxu0
        %v1218 = vadd.f32 0.0, %v1217
        %v1219 = vpop.f32.mrf.mxu0
        %v1220 = vadd.f32 0.0, %v1219
        %1221 = vmatmul.bf16.gmra.mxu0 %v804
        %v1222 = vpop.f32.mrf.mxu0
        %v1223 = vadd.f32 0.0, %v1222
        %v1224 = vpop.f32.mrf.mxu0
        %v1225 = vadd.f32 0.0, %v1224
        %1226 = vmatmul.bf16.gmra.mxu0 %v809
        %v1227 = vpop.f32.mrf.mxu0
        %v1228 = vadd.f32 0.0, %v1227
        %v1229 = vpop.f32.mrf.mxu0
        %v1230 = vadd.f32 0.0, %v1229
        %1231 = vmatmul.bf16.gmra.mxu0 %v814
        %v1232 = vpop.f32.mrf.mxu0
        %v1233 = vadd.f32 0.0, %v1232
        %v1234 = vpop.f32.mrf.mxu0
        %v1235 = vadd.f32 0.0, %v1234
        %1236 = vmatmul.bf16.gmra.mxu0 %v819
        %v1237 = vpop.f32.mrf.mxu0
        %v1238 = vadd.f32 0.0, %v1237
        %v1239 = vpop.f32.mrf.mxu0
        %v1240 = vadd.f32 0.0, %v1239
        %1241 = vmatmul.bf16.gmra.mxu0 %v824
        %v1242 = vpop.f32.mrf.mxu0
        %v1243 = vadd.f32 0.0, %v1242
        %v1244 = vpop.f32.mrf.mxu0
        %v1245 = vadd.f32 0.0, %v1244
        %1246 = vdwg.mxu0
        %1247 = vmatpush.bf16.msra.mxu0 %v1052
        %1248 = vmatpush.bf16.msra.mxu0 %v1051
        %1249 = vmatpush.bf16.msra.mxu0 %v1050
        %1250 = vmatpush.bf16.msra.mxu0 %v1049
        %1251 = vmatpush.bf16.msra.mxu0 %v1048
        %1252 = vmatpush.bf16.msra.mxu0 %v1047
        %1253 = vmatpush.bf16.msra.mxu0 %v1046
        %1254 = vmatpush.bf16.msra.mxu0 %v1045
        %1255 = vmatmul.bf16.gmra.mxu0 %v750
        %v1256 = vpop.f32.mrf.mxu0
        %v1257 = vadd.f32 %v1168, %v1256
        %v1258 = vpop.f32.mrf.mxu0
        %v1259 = vadd.f32 %v1170, %v1258
        %1260 = vmatmul.bf16.gmra.mxu0 %v755
        %v1261 = vpop.f32.mrf.mxu0
        %v1262 = vadd.f32 %v1173, %v1261
        %v1263 = vpop.f32.mrf.mxu0
        %v1264 = vadd.f32 %v1175, %v1263
        %1265 = vmatmul.bf16.gmra.mxu0 %v760
        %v1266 = vpop.f32.mrf.mxu0
        %v1267 = vadd.f32 %v1178, %v1266
        %v1268 = vpop.f32.mrf.mxu0
        %v1269 = vadd.f32 %v1180, %v1268
        %1270 = vmatmul.bf16.gmra.mxu0 %v765
        %v1271 = vpop.f32.mrf.mxu0
        %v1272 = vadd.f32 %v1183, %v1271
        %v1273 = vpop.f32.mrf.mxu0
        %v1274 = vadd.f32 %v1185, %v1273
        %1275 = vmatmul.bf16.gmra.mxu0 %v770
        %v1276 = vpop.f32.mrf.mxu0
        %v1277 = vadd.f32 %v1188, %v1276
        %v1278 = vpop.f32.mrf.mxu0
        %v1279 = vadd.f32 %v1190, %v1278
        %1280 = vmatmul.bf16.gmra.mxu0 %v775
        %v1281 = vpop.f32.mrf.mxu0
        %v1282 = vadd.f32 %v1193, %v1281
        %v1283 = vpop.f32.mrf.mxu0
        %v1284 = vadd.f32 %v1195, %v1283
        %1285 = vmatmul.bf16.gmra.mxu0 %v780
        %v1286 = vpop.f32.mrf.mxu0
        %v1287 = vadd.f32 %v1198, %v1286
        %v1288 = vpop.f32.mrf.mxu0
        %v1289 = vadd.f32 %v1200, %v1288
        %1290 = vmatmul.bf16.gmra.mxu0 %v785
        %v1291 = vpop.f32.mrf.mxu0
        %v1292 = vadd.f32 %v1203, %v1291
        %v1293 = vpop.f32.mrf.mxu0
        %v1294 = vadd.f32 %v1205, %v1293
        %1295 = vmatmul.bf16.gmra.mxu0 %v790
        %v1296 = vpop.f32.mrf.mxu0
        %v1297 = vadd.f32 %v1208, %v1296
        %v1298 = vpop.f32.mrf.mxu0
        %v1299 = vadd.f32 %v1210, %v1298
        %1300 = vmatmul.bf16.gmra.mxu0 %v795
        %v1301 = vpop.f32.mrf.mxu0
        %v1302 = vadd.f32 %v1213, %v1301
        %v1303 = vpop.f32.mrf.mxu0
        %v1304 = vadd.f32 %v1215, %v1303
        %1305 = vmatmul.bf16.gmra.mxu0 %v800
        %v1306 = vpop.f32.mrf.mxu0
        %v1307 = vadd.f32 %v1218, %v1306
        %v1308 = vpop.f32.mrf.mxu0
        %v1309 = vadd.f32 %v1220, %v1308
        %1310 = vmatmul.bf16.gmra.mxu0 %v805
        %v1311 = vpop.f32.mrf.mxu0
        %v1312 = vadd.f32 %v1223, %v1311
        %v1313 = vpop.f32.mrf.mxu0
        %v1314 = vadd.f32 %v1225, %v1313
        %1315 = vmatmul.bf16.gmra.mxu0 %v810
        %v1316 = vpop.f32.mrf.mxu0
        %v1317 = vadd.f32 %v1228, %v1316
        %v1318 = vpop.f32.mrf.mxu0
        %v1319 = vadd.f32 %v1230, %v1318
        %1320 = vmatmul.bf16.gmra.mxu0 %v815
        %v1321 = vpop.f32.mrf.mxu0
        %v1322 = vadd.f32 %v1233, %v1321
        %v1323 = vpop.f32.mrf.mxu0
        %v1324 = vadd.f32 %v1235, %v1323
        %1325 = vmatmul.bf16.gmra.mxu0 %v820
        %v1326 = vpop.f32.mrf.mxu0
        %v1327 = vadd.f32 %v1238, %v1326
        %v1328 = vpop.f32.mrf.mxu0
        %v1329 = vadd.f32 %v1240, %v1328
        %1330 = vmatmul.bf16.gmra.mxu0 %v825
        %v1331 = vpop.f32.mrf.mxu0
        %v1332 = vadd.f32 %v1243, %v1331
        %v1333 = vpop.f32.mrf.mxu0
        %v1334 = vadd.f32 %v1245, %v1333
        %1335 = vdwg.mxu0
        %1336 = vmatpush.bf16.msra.mxu0 %v1060
        %1337 = vmatpush.bf16.msra.mxu0 %v1059
        %1338 = vmatpush.bf16.msra.mxu0 %v1058
        %1339 = vmatpush.bf16.msra.mxu0 %v1057
        %1340 = vmatpush.bf16.msra.mxu0 %v1056
        %1341 = vmatpush.bf16.msra.mxu0 %v1055
        %1342 = vmatpush.bf16.msra.mxu0 %v1054
        %1343 = vmatpush.bf16.msra.mxu0 %v1053
        %1344 = vmatmul.bf16.gmra.mxu0 %v751
        %v1345 = vpop.f32.mrf.mxu0
        %v1346 = vadd.f32 %v1257, %v1345
        %v1347 = vpop.f32.mrf.mxu0
        %v1348 = vadd.f32 %v1259, %v1347
        %1349 = vmatmul.bf16.gmra.mxu0 %v756
        %v1350 = vpop.f32.mrf.mxu0
        %v1351 = vadd.f32 %v1262, %v1350
        %v1352 = vpop.f32.mrf.mxu0
        %v1353 = vadd.f32 %v1264, %v1352
        %1354 = vmatmul.bf16.gmra.mxu0 %v761
        %v1355 = vpop.f32.mrf.mxu0
        %v1356 = vadd.f32 %v1267, %v1355
        %v1357 = vpop.f32.mrf.mxu0
        %v1358 = vadd.f32 %v1269, %v1357
        %1359 = vmatmul.bf16.gmra.mxu0 %v766
        %v1360 = vpop.f32.mrf.mxu0
        %v1361 = vadd.f32 %v1272, %v1360
        %v1362 = vpop.f32.mrf.mxu0
        %v1363 = vadd.f32 %v1274, %v1362
        %1364 = vmatmul.bf16.gmra.mxu0 %v771
        %v1365 = vpop.f32.mrf.mxu0
        %v1366 = vadd.f32 %v1277, %v1365
        %v1367 = vpop.f32.mrf.mxu0
        %v1368 = vadd.f32 %v1279, %v1367
        %1369 = vmatmul.bf16.gmra.mxu0 %v776
        %v1370 = vpop.f32.mrf.mxu0
        %v1371 = vadd.f32 %v1282, %v1370
        %v1372 = vpop.f32.mrf.mxu0
        %v1373 = vadd.f32 %v1284, %v1372
        %1374 = vmatmul.bf16.gmra.mxu0 %v781
        %v1375 = vpop.f32.mrf.mxu0
        %v1376 = vadd.f32 %v1287, %v1375
        %v1377 = vpop.f32.mrf.mxu0
        %v1378 = vadd.f32 %v1289, %v1377
        %1379 = vmatmul.bf16.gmra.mxu0 %v786
        %v1380 = vpop.f32.mrf.mxu0
        %v1381 = vadd.f32 %v1292, %v1380
        %v1382 = vpop.f32.mrf.mxu0
        %v1383 = vadd.f32 %v1294, %v1382
        %1384 = vmatmul.bf16.gmra.mxu0 %v791
        %v1385 = vpop.f32.mrf.mxu0
        %v1386 = vadd.f32 %v1297, %v1385
        %v1387 = vpop.f32.mrf.mxu0
        %v1388 = vadd.f32 %v1299, %v1387
        %1389 = vmatmul.bf16.gmra.mxu0 %v796
        %v1390 = vpop.f32.mrf.mxu0
        %v1391 = vadd.f32 %v1302, %v1390
        %v1392 = vpop.f32.mrf.mxu0
        %v1393 = vadd.f32 %v1304, %v1392
        %1394 = vmatmul.bf16.gmra.mxu0 %v801
        %v1395 = vpop.f32.mrf.mxu0
        %v1396 = vadd.f32 %v1307, %v1395
        %v1397 = vpop.f32.mrf.mxu0
        %v1398 = vadd.f32 %v1309, %v1397
        %1399 = vmatmul.bf16.gmra.mxu0 %v806
        %v1400 = vpop.f32.mrf.mxu0
        %v1401 = vadd.f32 %v1312, %v1400
        %v1402 = vpop.f32.mrf.mxu0
        %v1403 = vadd.f32 %v1314, %v1402
        %1404 = vmatmul.bf16.gmra.mxu0 %v811
        %v1405 = vpop.f32.mrf.mxu0
        %v1406 = vadd.f32 %v1317, %v1405
        %v1407 = vpop.f32.mrf.mxu0
        %v1408 = vadd.f32 %v1319, %v1407
        %1409 = vmatmul.bf16.gmra.mxu0 %v816
        %v1410 = vpop.f32.mrf.mxu0
        %v1411 = vadd.f32 %v1322, %v1410
        %v1412 = vpop.f32.mrf.mxu0
        %v1413 = vadd.f32 %v1324, %v1412
        %1414 = vmatmul.bf16.gmra.mxu0 %v821
        %v1415 = vpop.f32.mrf.mxu0
        %v1416 = vadd.f32 %v1327, %v1415
        %v1417 = vpop.f32.mrf.mxu0
        %v1418 = vadd.f32 %v1329, %v1417
        %1419 = vmatmul.bf16.gmra.mxu0 %v826
        %v1420 = vpop.f32.mrf.mxu0
        %v1421 = vadd.f32 %v1332, %v1420
        %v1422 = vpop.f32.mrf.mxu0
        %v1423 = vadd.f32 %v1334, %v1422
        %1424 = vdwg.mxu0
        %1425 = vmatpush.bf16.msra.mxu0 %v1068
        %1426 = vmatpush.bf16.msra.mxu0 %v1067
        %1427 = vmatpush.bf16.msra.mxu0 %v1066
        %1428 = vmatpush.bf16.msra.mxu0 %v1065
        %1429 = vmatpush.bf16.msra.mxu0 %v1064
        %1430 = vmatpush.bf16.msra.mxu0 %v1063
        %1431 = vmatpush.bf16.msra.mxu0 %v1062
        %1432 = vmatpush.bf16.msra.mxu0 %v1061
        %1433 = vmatmul.bf16.gmra.mxu0 %v752
        %v1434 = vpop.f32.mrf.mxu0
        %v1435 = vadd.f32 %v1346, %v1434
        %v1436 = vpop.f32.mrf.mxu0
        %v1437 = vadd.f32 %v1348, %v1436
        %1438 = vmatmul.bf16.gmra.mxu0 %v757
        %v1439 = vpop.f32.mrf.mxu0
        %v1440 = vadd.f32 %v1351, %v1439
        %v1441 = vpop.f32.mrf.mxu0
        %v1442 = vadd.f32 %v1353, %v1441
        %1443 = vmatmul.bf16.gmra.mxu0 %v762
        %v1444 = vpop.f32.mrf.mxu0
        %v1445 = vadd.f32 %v1356, %v1444
        %v1446 = vpop.f32.mrf.mxu0
        %v1447 = vadd.f32 %v1358, %v1446
        %1448 = vmatmul.bf16.gmra.mxu0 %v767
        %v1449 = vpop.f32.mrf.mxu0
        %v1450 = vadd.f32 %v1361, %v1449
        %v1451 = vpop.f32.mrf.mxu0
        %v1452 = vadd.f32 %v1363, %v1451
        %1453 = vmatmul.bf16.gmra.mxu0 %v772
        %v1454 = vpop.f32.mrf.mxu0
        %v1455 = vadd.f32 %v1366, %v1454
        %v1456 = vpop.f32.mrf.mxu0
        %v1457 = vadd.f32 %v1368, %v1456
        %1458 = vmatmul.bf16.gmra.mxu0 %v777
        %v1459 = vpop.f32.mrf.mxu0
        %v1460 = vadd.f32 %v1371, %v1459
        %v1461 = vpop.f32.mrf.mxu0
        %v1462 = vadd.f32 %v1373, %v1461
        %1463 = vmatmul.bf16.gmra.mxu0 %v782
        %v1464 = vpop.f32.mrf.mxu0
        %v1465 = vadd.f32 %v1376, %v1464
        %v1466 = vpop.f32.mrf.mxu0
        %v1467 = vadd.f32 %v1378, %v1466
        %1468 = vmatmul.bf16.gmra.mxu0 %v787
        %v1469 = vpop.f32.mrf.mxu0
        %v1470 = vadd.f32 %v1381, %v1469
        %v1471 = vpop.f32.mrf.mxu0
        %v1472 = vadd.f32 %v1383, %v1471
        %1473 = vmatmul.bf16.gmra.mxu0 %v792
        %v1474 = vpop.f32.mrf.mxu0
        %v1475 = vadd.f32 %v1386, %v1474
        %v1476 = vpop.f32.mrf.mxu0
        %v1477 = vadd.f32 %v1388, %v1476
        %1478 = vmatmul.bf16.gmra.mxu0 %v797
        %v1479 = vpop.f32.mrf.mxu0
        %v1480 = vadd.f32 %v1391, %v1479
        %v1481 = vpop.f32.mrf.mxu0
        %v1482 = vadd.f32 %v1393, %v1481
        %1483 = vmatmul.bf16.gmra.mxu0 %v802
        %v1484 = vpop.f32.mrf.mxu0
        %v1485 = vadd.f32 %v1396, %v1484
        %v1486 = vpop.f32.mrf.mxu0
        %v1487 = vadd.f32 %v1398, %v1486
        %1488 = vmatmul.bf16.gmra.mxu0 %v807
        %v1489 = vpop.f32.mrf.mxu0
        %v1490 = vadd.f32 %v1401, %v1489
        %v1491 = vpop.f32.mrf.mxu0
        %v1492 = vadd.f32 %v1403, %v1491
        %1493 = vmatmul.bf16.gmra.mxu0 %v812
        %v1494 = vpop.f32.mrf.mxu0
        %v1495 = vadd.f32 %v1406, %v1494
        %v1496 = vpop.f32.mrf.mxu0
        %v1497 = vadd.f32 %v1408, %v1496
        %1498 = vmatmul.bf16.gmra.mxu0 %v817
        %v1499 = vpop.f32.mrf.mxu0
        %v1500 = vadd.f32 %v1411, %v1499
        %v1501 = vpop.f32.mrf.mxu0
        %v1502 = vadd.f32 %v1413, %v1501
        %1503 = vmatmul.bf16.gmra.mxu0 %v822
        %v1504 = vpop.f32.mrf.mxu0
        %v1505 = vadd.f32 %v1416, %v1504
        %v1506 = vpop.f32.mrf.mxu0
        %v1507 = vadd.f32 %v1418, %v1506
        %1508 = vmatmul.bf16.gmra.mxu0 %v827
        %v1509 = vpop.f32.mrf.mxu0
        %v1510 = vadd.f32 %v1421, %v1509
        %v1511 = vpop.f32.mrf.mxu0
        %v1512 = vadd.f32 %v1423, %v1511
        %1513 = vdwg.mxu0
        %1514 = vmatpush.bf16.msra.mxu0 0
        %1515 = vmatpush.bf16.msra.mxu0 0
        %1516 = vmatpush.bf16.msra.mxu0 0
        %1517 = vmatpush.bf16.msra.mxu0 0
        %1518 = vmatpush.bf16.msra.mxu0 %v1072
        %1519 = vmatpush.bf16.msra.mxu0 %v1071
        %1520 = vmatpush.bf16.msra.mxu0 %v1070
        %1521 = vmatpush.bf16.msra.mxu0 %v1069
        %1522 = vmatmul.bf16.gmra.mxu0 %v1111
        %v1523 = vpop.f32.mrf.mxu0
        %v1524 = vadd.f32 %v1435, %v1523
        %v1525 = vpop.f32.mrf.mxu0
        %v1526 = vadd.f32 %v1437, %v1525
        %1527 = vmatmul.bf16.gmra.mxu0 %v1114
        %v1528 = vpop.f32.mrf.mxu0
        %v1529 = vadd.f32 %v1440, %v1528
        %v1530 = vpop.f32.mrf.mxu0
        %v1531 = vadd.f32 %v1442, %v1530
        %1532 = vmatmul.bf16.gmra.mxu0 %v1117
        %v1533 = vpop.f32.mrf.mxu0
        %v1534 = vadd.f32 %v1445, %v1533
        %v1535 = vpop.f32.mrf.mxu0
        %v1536 = vadd.f32 %v1447, %v1535
        %1537 = vmatmul.bf16.gmra.mxu0 %v1120
        %v1538 = vpop.f32.mrf.mxu0
        %v1539 = vadd.f32 %v1450, %v1538
        %v1540 = vpop.f32.mrf.mxu0
        %v1541 = vadd.f32 %v1452, %v1540
        %1542 = vmatmul.bf16.gmra.mxu0 %v1123
        %v1543 = vpop.f32.mrf.mxu0
        %v1544 = vadd.f32 %v1455, %v1543
        %v1545 = vpop.f32.mrf.mxu0
        %v1546 = vadd.f32 %v1457, %v1545
        %1547 = vmatmul.bf16.gmra.mxu0 %v1126
        %v1548 = vpop.f32.mrf.mxu0
        %v1549 = vadd.f32 %v1460, %v1548
        %v1550 = vpop.f32.mrf.mxu0
        %v1551 = vadd.f32 %v1462, %v1550
        %1552 = vmatmul.bf16.gmra.mxu0 %v1129
        %v1553 = vpop.f32.mrf.mxu0
        %v1554 = vadd.f32 %v1465, %v1553
        %v1555 = vpop.f32.mrf.mxu0
        %v1556 = vadd.f32 %v1467, %v1555
        %1557 = vmatmul.bf16.gmra.mxu0 %v1132
        %v1558 = vpop.f32.mrf.mxu0
        %v1559 = vadd.f32 %v1470, %v1558
        %v1560 = vpop.f32.mrf.mxu0
        %v1561 = vadd.f32 %v1472, %v1560
        %1562 = vmatmul.bf16.gmra.mxu0 %v1135
        %v1563 = vpop.f32.mrf.mxu0
        %v1564 = vadd.f32 %v1475, %v1563
        %v1565 = vpop.f32.mrf.mxu0
        %v1566 = vadd.f32 %v1477, %v1565
        %1567 = vmatmul.bf16.gmra.mxu0 %v1138
        %v1568 = vpop.f32.mrf.mxu0
        %v1569 = vadd.f32 %v1480, %v1568
        %v1570 = vpop.f32.mrf.mxu0
        %v1571 = vadd.f32 %v1482, %v1570
        %1572 = vmatmul.bf16.gmra.mxu0 %v1141
        %v1573 = vpop.f32.mrf.mxu0
        %v1574 = vadd.f32 %v1485, %v1573
        %v1575 = vpop.f32.mrf.mxu0
        %v1576 = vadd.f32 %v1487, %v1575
        %1577 = vmatmul.bf16.gmra.mxu0 %v1144
        %v1578 = vpop.f32.mrf.mxu0
        %v1579 = vadd.f32 %v1490, %v1578
        %v1580 = vpop.f32.mrf.mxu0
        %v1581 = vadd.f32 %v1492, %v1580
        %1582 = vmatmul.bf16.gmra.mxu0 %v1147
        %v1583 = vpop.f32.mrf.mxu0
        %v1584 = vadd.f32 %v1495, %v1583
        %v1585 = vpop.f32.mrf.mxu0
        %v1586 = vadd.f32 %v1497, %v1585
        %1587 = vmatmul.bf16.gmra.mxu0 %v1150
        %v1588 = vpop.f32.mrf.mxu0
        %v1589 = vadd.f32 %v1500, %v1588
        %v1590 = vpop.f32.mrf.mxu0
        %v1591 = vadd.f32 %v1502, %v1590
        %1592 = vmatmul.bf16.gmra.mxu0 %v1153
        %v1593 = vpop.f32.mrf.mxu0
        %v1594 = vadd.f32 %v1505, %v1593
        %v1595 = vpop.f32.mrf.mxu0
        %v1596 = vadd.f32 %v1507, %v1595
        %1597 = vmatmul.bf16.gmra.mxu0 %v1156
        %v1598 = vpop.f32.mrf.mxu0
        %v1599 = vadd.f32 %v1510, %v1598
        %v1600 = vpop.f32.mrf.mxu0
        %v1601 = vadd.f32 %v1512, %v1600
        %1602 = vdwg.mxu0
        %v1603 = vld [vmem:[%s318] sm:$0x1]
        %v1604 = vld [vmem:[%s321] sm:$0x1]
        %v1606 = vperm.slane %v1603, 0
        %v1608 = vmul.f32 %v1524, %v1606
        %v1609 = vmul.f32 %v1526, %v1606
        %v1610 = vmul.f32 %v1529, %v1606
        %v1611 = vmul.f32 %v1531, %v1606
        %v1612 = vmul.f32 %v1534, %v1606
        %v1613 = vmul.f32 %v1536, %v1606
        %v1614 = vmul.f32 %v1539, %v1606
        %v1615 = vmul.f32 %v1541, %v1606
        %v1616 = vmul.f32 %v1544, %v1606
        %v1617 = vmul.f32 %v1546, %v1606
        %v1618 = vmul.f32 %v1549, %v1606
        %v1619 = vmul.f32 %v1551, %v1606
        %v1620 = vmul.f32 %v1554, %v1606
        %v1621 = vmul.f32 %v1556, %v1606
        %v1622 = vmul.f32 %v1559, %v1606
        %v1623 = vmul.f32 %v1561, %v1606
        %v1624 = vmul.f32 %v1564, %v1606
        %v1625 = vmul.f32 %v1566, %v1606
        %v1626 = vmul.f32 %v1569, %v1606
        %v1627 = vmul.f32 %v1571, %v1606
        %v1628 = vmul.f32 %v1574, %v1606
        %v1629 = vmul.f32 %v1576, %v1606
        %v1630 = vmul.f32 %v1579, %v1606
        %v1631 = vmul.f32 %v1581, %v1606
        %v1632 = vmul.f32 %v1584, %v1606
        %v1633 = vmul.f32 %v1586, %v1606
        %v1634 = vmul.f32 %v1589, %v1606
        %v1635 = vmul.f32 %v1591, %v1606
        %v1636 = vmul.f32 %v1594, %v1606
        %v1637 = vmul.f32 %v1596, %v1606
        %v1638 = vmul.f32 %v1599, %v1606
        %v1639 = vmul.f32 %v1601, %v1606
        %v1641 = vperm.slane %v1604, 0
        %v1643 = vadd.f32 %v1608, %v1641
        %v1644 = vadd.f32 %v1609, %v1641
        %v1645 = vadd.f32 %v1610, %v1641
        %v1646 = vadd.f32 %v1611, %v1641
        %v1647 = vadd.f32 %v1612, %v1641
        %v1648 = vadd.f32 %v1613, %v1641
        %v1649 = vadd.f32 %v1614, %v1641
        %v1650 = vadd.f32 %v1615, %v1641
        %v1651 = vadd.f32 %v1616, %v1641
        %v1652 = vadd.f32 %v1617, %v1641
        %v1653 = vadd.f32 %v1618, %v1641
        %v1654 = vadd.f32 %v1619, %v1641
        %v1655 = vadd.f32 %v1620, %v1641
        %v1656 = vadd.f32 %v1621, %v1641
        %v1657 = vadd.f32 %v1622, %v1641
        %v1658 = vadd.f32 %v1623, %v1641
        %v1659 = vadd.f32 %v1624, %v1641
        %v1660 = vadd.f32 %v1625, %v1641
        %v1661 = vadd.f32 %v1626, %v1641
        %v1662 = vadd.f32 %v1627, %v1641
        %v1663 = vadd.f32 %v1628, %v1641
        %v1664 = vadd.f32 %v1629, %v1641
        %v1665 = vadd.f32 %v1630, %v1641
        %v1666 = vadd.f32 %v1631, %v1641
        %v1667 = vadd.f32 %v1632, %v1641
        %v1668 = vadd.f32 %v1633, %v1641
        %v1669 = vadd.f32 %v1634, %v1641
        %v1670 = vadd.f32 %v1635, %v1641
        %v1671 = vadd.f32 %v1636, %v1641
        %v1672 = vadd.f32 %v1637, %v1641
        %v1673 = vadd.f32 %v1638, %v1641
        %v1674 = vadd.f32 %v1639, %v1641
        %v1675 = vand.u32 2147483647, %v1643
        %v1676 = vand.u32 2147483647, %v1644
        %v1677 = vand.u32 2147483647, %v1645
        %v1678 = vand.u32 2147483647, %v1646
        %v1679 = vand.u32 2147483647, %v1647
        %v1680 = vand.u32 2147483647, %v1648
        %v1681 = vand.u32 2147483647, %v1649
        %v1682 = vand.u32 2147483647, %v1650
        %v1683 = vand.u32 2147483647, %v1651
        %v1684 = vand.u32 2147483647, %v1652
        %v1685 = vand.u32 2147483647, %v1653
        %v1686 = vand.u32 2147483647, %v1654
        %v1687 = vand.u32 2147483647, %v1655
        %v1688 = vand.u32 2147483647, %v1656
        %v1689 = vand.u32 2147483647, %v1657
        %v1690 = vand.u32 2147483647, %v1658
        %v1691 = vand.u32 2147483647, %v1659
        %v1692 = vand.u32 2147483647, %v1660
        %v1693 = vand.u32 2147483647, %v1661
        %v1694 = vand.u32 2147483647, %v1662
        %v1695 = vand.u32 2147483647, %v1663
        %v1696 = vand.u32 2147483647, %v1664
        %v1697 = vand.u32 2147483647, %v1665
        %v1698 = vand.u32 2147483647, %v1666
        %v1699 = vand.u32 2147483647, %v1667
        %v1700 = vand.u32 2147483647, %v1668
        %v1701 = vand.u32 2147483647, %v1669
        %v1702 = vand.u32 2147483647, %v1670
        %v1703 = vand.u32 2147483647, %v1671
        %v1704 = vand.u32 2147483647, %v1672
        %v1705 = vand.u32 2147483647, %v1673
        %v1706 = vand.u32 2147483647, %v1674
        %v1707 = vsub.f32 0.0, %v1675
        %v1708 = vsub.f32 0.0, %v1676
        %v1709 = vsub.f32 0.0, %v1677
        %v1710 = vsub.f32 0.0, %v1678
        %v1711 = vsub.f32 0.0, %v1679
        %v1712 = vsub.f32 0.0, %v1680
        %v1713 = vsub.f32 0.0, %v1681
        %v1714 = vsub.f32 0.0, %v1682
        %v1715 = vsub.f32 0.0, %v1683
        %v1716 = vsub.f32 0.0, %v1684
        %v1717 = vsub.f32 0.0, %v1685
        %v1718 = vsub.f32 0.0, %v1686
        %v1719 = vsub.f32 0.0, %v1687
        %v1720 = vsub.f32 0.0, %v1688
        %v1721 = vsub.f32 0.0, %v1689
        %v1722 = vsub.f32 0.0, %v1690
        %v1723 = vsub.f32 0.0, %v1691
        %v1724 = vsub.f32 0.0, %v1692
        %v1725 = vsub.f32 0.0, %v1693
        %v1726 = vsub.f32 0.0, %v1694
        %v1727 = vsub.f32 0.0, %v1695
        %v1728 = vsub.f32 0.0, %v1696
        %v1729 = vsub.f32 0.0, %v1697
        %v1730 = vsub.f32 0.0, %v1698
        %v1731 = vsub.f32 0.0, %v1699
        %v1732 = vsub.f32 0.0, %v1700
        %v1733 = vsub.f32 0.0, %v1701
        %v1734 = vsub.f32 0.0, %v1702
        %v1735 = vsub.f32 0.0, %v1703
        %v1736 = vsub.f32 0.0, %v1704
        %v1737 = vsub.f32 0.0, %v1705
        %v1738 = vsub.f32 0.0, %v1706
        %v1739 = vmul.f32 %v1707, 1.442695
        %v1740 = vpow.pop %v1739
        %v1741 = vmul.f32 %v1708, 1.442695
        %v1742 = vpow.pop %v1741
        %v1743 = vmul.f32 %v1709, 1.442695
        %v1744 = vpow.pop %v1743
        %v1745 = vmul.f32 %v1710, 1.442695
        %v1746 = vpow.pop %v1745
        %v1747 = vmul.f32 %v1711, 1.442695
        %v1748 = vpow.pop %v1747
        %v1749 = vmul.f32 %v1712, 1.442695
        %v1750 = vpow.pop %v1749
        %v1751 = vmul.f32 %v1713, 1.442695
        %v1752 = vpow.pop %v1751
        %v1753 = vmul.f32 %v1714, 1.442695
        %v1754 = vpow.pop %v1753
        %v1755 = vmul.f32 %v1715, 1.442695
        %v1756 = vpow.pop %v1755
        %v1757 = vmul.f32 %v1716, 1.442695
        %v1758 = vpow.pop %v1757
        %v1759 = vmul.f32 %v1717, 1.442695
        %v1760 = vpow.pop %v1759
        %v1761 = vmul.f32 %v1718, 1.442695
        %v1762 = vpow.pop %v1761
        %v1763 = vmul.f32 %v1719, 1.442695
        %v1764 = vpow.pop %v1763
        %v1765 = vmul.f32 %v1720, 1.442695
        %v1766 = vpow.pop %v1765
        %v1767 = vmul.f32 %v1721, 1.442695
        %v1768 = vpow.pop %v1767
        %v1769 = vmul.f32 %v1722, 1.442695
        %v1770 = vpow.pop %v1769
        %v1771 = vmul.f32 %v1723, 1.442695
        %v1772 = vpow.pop %v1771
        %v1773 = vmul.f32 %v1724, 1.442695
        %v1774 = vpow.pop %v1773
        %v1775 = vmul.f32 %v1725, 1.442695
        %v1776 = vpow.pop %v1775
        %v1777 = vmul.f32 %v1726, 1.442695
        %v1778 = vpow.pop %v1777
        %v1779 = vmul.f32 %v1727, 1.442695
        %v1780 = vpow.pop %v1779
        %v1781 = vmul.f32 %v1728, 1.442695
        %v1782 = vpow.pop %v1781
        %v1783 = vmul.f32 %v1729, 1.442695
        %v1784 = vpow.pop %v1783
        %v1785 = vmul.f32 %v1730, 1.442695
        %v1786 = vpow.pop %v1785
        %v1787 = vmul.f32 %v1731, 1.442695
        %v1788 = vpow.pop %v1787
        %v1789 = vmul.f32 %v1732, 1.442695
        %v1790 = vpow.pop %v1789
        %v1791 = vmul.f32 %v1733, 1.442695
        %v1792 = vpow.pop %v1791
        %v1793 = vmul.f32 %v1734, 1.442695
        %v1794 = vpow.pop %v1793
        %v1795 = vmul.f32 %v1735, 1.442695
        %v1796 = vpow.pop %v1795
        %v1797 = vmul.f32 %v1736, 1.442695
        %v1798 = vpow.pop %v1797
        %v1799 = vmul.f32 %v1737, 1.442695
        %v1800 = vpow.pop %v1799
        %v1801 = vmul.f32 %v1738, 1.442695
        %v1802 = vpow.pop %v1801
        %vm1803 = vcmp.ge.f32.partialorder %v1643, 0.0
        %vm1804 = vcmp.ge.f32.partialorder %v1644, 0.0
        %vm1805 = vcmp.ge.f32.partialorder %v1645, 0.0
        %vm1806 = vcmp.ge.f32.partialorder %v1646, 0.0
        %vm1807 = vcmp.ge.f32.partialorder %v1647, 0.0
        %vm1808 = vcmp.ge.f32.partialorder %v1648, 0.0
        %vm1809 = vcmp.ge.f32.partialorder %v1649, 0.0
        %vm1810 = vcmp.ge.f32.partialorder %v1650, 0.0
        %vm1811 = vcmp.ge.f32.partialorder %v1651, 0.0
        %vm1812 = vcmp.ge.f32.partialorder %v1652, 0.0
        %vm1813 = vcmp.ge.f32.partialorder %v1653, 0.0
        %vm1814 = vcmp.ge.f32.partialorder %v1654, 0.0
        %vm1815 = vcmp.ge.f32.partialorder %v1655, 0.0
        %vm1816 = vcmp.ge.f32.partialorder %v1656, 0.0
        %vm1817 = vcmp.ge.f32.partialorder %v1657, 0.0
        %vm1818 = vcmp.ge.f32.partialorder %v1658, 0.0
        %vm1819 = vcmp.ge.f32.partialorder %v1659, 0.0
        %vm1820 = vcmp.ge.f32.partialorder %v1660, 0.0
        %vm1821 = vcmp.ge.f32.partialorder %v1661, 0.0
        %vm1822 = vcmp.ge.f32.partialorder %v1662, 0.0
        %vm1823 = vcmp.ge.f32.partialorder %v1663, 0.0
        %vm1824 = vcmp.ge.f32.partialorder %v1664, 0.0
        %vm1825 = vcmp.ge.f32.partialorder %v1665, 0.0
        %vm1826 = vcmp.ge.f32.partialorder %v1666, 0.0
        %vm1827 = vcmp.ge.f32.partialorder %v1667, 0.0
        %vm1828 = vcmp.ge.f32.partialorder %v1668, 0.0
        %vm1829 = vcmp.ge.f32.partialorder %v1669, 0.0
        %vm1830 = vcmp.ge.f32.partialorder %v1670, 0.0
        %vm1831 = vcmp.ge.f32.partialorder %v1671, 0.0
        %vm1832 = vcmp.ge.f32.partialorder %v1672, 0.0
        %vm1833 = vcmp.ge.f32.partialorder %v1673, 0.0
        %vm1834 = vcmp.ge.f32.partialorder %v1674, 0.0
        %v1835 = vsel %vm1803, %v1740, 1.0
        %v1836 = vsel %vm1804, %v1742, 1.0
        %v1837 = vsel %vm1805, %v1744, 1.0
        %v1838 = vsel %vm1806, %v1746, 1.0
        %v1839 = vsel %vm1807, %v1748, 1.0
        %v1840 = vsel %vm1808, %v1750, 1.0
        %v1841 = vsel %vm1809, %v1752, 1.0
        %v1842 = vsel %vm1810, %v1754, 1.0
        %v1843 = vsel %vm1811, %v1756, 1.0
        %v1844 = vsel %vm1812, %v1758, 1.0
        %v1845 = vsel %vm1813, %v1760, 1.0
        %v1846 = vsel %vm1814, %v1762, 1.0
        %v1847 = vsel %vm1815, %v1764, 1.0
        %v1848 = vsel %vm1816, %v1766, 1.0
        %v1849 = vsel %vm1817, %v1768, 1.0
        %v1850 = vsel %vm1818, %v1770, 1.0
        %v1851 = vsel %vm1819, %v1772, 1.0
        %v1852 = vsel %vm1820, %v1774, 1.0
        %v1853 = vsel %vm1821, %v1776, 1.0
        %v1854 = vsel %vm1822, %v1778, 1.0
        %v1855 = vsel %vm1823, %v1780, 1.0
        %v1856 = vsel %vm1824, %v1782, 1.0
        %v1857 = vsel %vm1825, %v1784, 1.0
        %v1858 = vsel %vm1826, %v1786, 1.0
        %v1859 = vsel %vm1827, %v1788, 1.0
        %v1860 = vsel %vm1828, %v1790, 1.0
        %v1861 = vsel %vm1829, %v1792, 1.0
        %v1862 = vsel %vm1830, %v1794, 1.0
        %v1863 = vsel %vm1831, %v1796, 1.0
        %v1864 = vsel %vm1832, %v1798, 1.0
        %v1865 = vsel %vm1833, %v1800, 1.0
        %v1866 = vsel %vm1834, %v1802, 1.0
        %v1867 = vadd.f32 %v1740, 1.0
        %v1868 = vadd.f32 %v1742, 1.0
        %v1869 = vadd.f32 %v1744, 1.0
        %v1870 = vadd.f32 %v1746, 1.0
        %v1871 = vadd.f32 %v1748, 1.0
        %v1872 = vadd.f32 %v1750, 1.0
        %v1873 = vadd.f32 %v1752, 1.0
        %v1874 = vadd.f32 %v1754, 1.0
        %v1875 = vadd.f32 %v1756, 1.0
        %v1876 = vadd.f32 %v1758, 1.0
        %v1877 = vadd.f32 %v1760, 1.0
        %v1878 = vadd.f32 %v1762, 1.0
        %v1879 = vadd.f32 %v1764, 1.0
        %v1880 = vadd.f32 %v1766, 1.0
        %v1881 = vadd.f32 %v1768, 1.0
        %v1882 = vadd.f32 %v1770, 1.0
        %v1883 = vadd.f32 %v1772, 1.0
        %v1884 = vadd.f32 %v1774, 1.0
        %v1885 = vadd.f32 %v1776, 1.0
        %v1886 = vadd.f32 %v1778, 1.0
        %v1887 = vadd.f32 %v1780, 1.0
        %v1888 = vadd.f32 %v1782, 1.0
        %v1889 = vadd.f32 %v1784, 1.0
        %v1890 = vadd.f32 %v1786, 1.0
        %v1891 = vadd.f32 %v1788, 1.0
        %v1892 = vadd.f32 %v1790, 1.0
        %v1893 = vadd.f32 %v1792, 1.0
        %v1894 = vadd.f32 %v1794, 1.0
        %v1895 = vadd.f32 %v1796, 1.0
        %v1896 = vadd.f32 %v1798, 1.0
        %v1897 = vadd.f32 %v1800, 1.0
        %v1898 = vadd.f32 %v1802, 1.0
        %v1899 = vrcp.pop %v1867
        %v1900 = vrcp.pop %v1868
        %v1901 = vrcp.pop %v1869
        %v1902 = vrcp.pop %v1870
        %v1903 = vrcp.pop %v1871
        %v1904 = vrcp.pop %v1872
        %v1905 = vrcp.pop %v1873
        %v1906 = vrcp.pop %v1874
        %v1907 = vrcp.pop %v1875
        %v1908 = vrcp.pop %v1876
        %v1909 = vrcp.pop %v1877
        %v1910 = vrcp.pop %v1878
        %v1911 = vrcp.pop %v1879
        %v1912 = vrcp.pop %v1880
        %v1913 = vrcp.pop %v1881
        %v1914 = vrcp.pop %v1882
        %v1915 = vrcp.pop %v1883
        %v1916 = vrcp.pop %v1884
        %v1917 = vrcp.pop %v1885
        %v1918 = vrcp.pop %v1886
        %v1919 = vrcp.pop %v1887
        %v1920 = vrcp.pop %v1888
        %v1921 = vrcp.pop %v1889
        %v1922 = vrcp.pop %v1890
        %v1923 = vrcp.pop %v1891
        %v1924 = vrcp.pop %v1892
        %v1925 = vrcp.pop %v1893
        %v1926 = vrcp.pop %v1894
        %v1927 = vrcp.pop %v1895
        %v1928 = vrcp.pop %v1896
        %v1929 = vrcp.pop %v1897
        %v1930 = vrcp.pop %v1898
        %v1931 = vmul.f32 %v1835, %v1899
        %v1932 = vmul.f32 %v1836, %v1900
        %v1933 = vmul.f32 %v1837, %v1901
        %v1934 = vmul.f32 %v1838, %v1902
        %v1935 = vmul.f32 %v1839, %v1903
        %v1936 = vmul.f32 %v1840, %v1904
        %v1937 = vmul.f32 %v1841, %v1905
        %v1938 = vmul.f32 %v1842, %v1906
        %v1939 = vmul.f32 %v1843, %v1907
        %v1940 = vmul.f32 %v1844, %v1908
        %v1941 = vmul.f32 %v1845, %v1909
        %v1942 = vmul.f32 %v1846, %v1910
        %v1943 = vmul.f32 %v1847, %v1911
        %v1944 = vmul.f32 %v1848, %v1912
        %v1945 = vmul.f32 %v1849, %v1913
        %v1946 = vmul.f32 %v1850, %v1914
        %v1947 = vmul.f32 %v1851, %v1915
        %v1948 = vmul.f32 %v1852, %v1916
        %v1949 = vmul.f32 %v1853, %v1917
        %v1950 = vmul.f32 %v1854, %v1918
        %v1951 = vmul.f32 %v1855, %v1919
        %v1952 = vmul.f32 %v1856, %v1920
        %v1953 = vmul.f32 %v1857, %v1921
        %v1954 = vmul.f32 %v1858, %v1922
        %v1955 = vmul.f32 %v1859, %v1923
        %v1956 = vmul.f32 %v1860, %v1924
        %v1957 = vmul.f32 %v1861, %v1925
        %v1958 = vmul.f32 %v1862, %v1926
        %v1959 = vmul.f32 %v1863, %v1927
        %v1960 = vmul.f32 %v1864, %v1928
        %v1961 = vmul.f32 %v1865, %v1929
        %v1962 = vmul.f32 %v1866, %v1930
        %v1963 = vmul.f32 %v1931, %v1931
        %v1964 = vmul.f32 %v1932, %v1932
        %v1965 = vmul.f32 %v1933, %v1933
        %v1966 = vmul.f32 %v1934, %v1934
        %v1967 = vmul.f32 %v1935, %v1935
        %v1968 = vmul.f32 %v1936, %v1936
        %v1969 = vmul.f32 %v1937, %v1937
        %v1970 = vmul.f32 %v1938, %v1938
        %v1971 = vmul.f32 %v1939, %v1939
        %v1972 = vmul.f32 %v1940, %v1940
        %v1973 = vmul.f32 %v1941, %v1941
        %v1974 = vmul.f32 %v1942, %v1942
        %v1975 = vmul.f32 %v1943, %v1943
        %v1976 = vmul.f32 %v1944, %v1944
        %v1977 = vmul.f32 %v1945, %v1945
        %v1978 = vmul.f32 %v1946, %v1946
        %v1979 = vmul.f32 %v1947, %v1947
        %v1980 = vmul.f32 %v1948, %v1948
        %v1981 = vmul.f32 %v1949, %v1949
        %v1982 = vmul.f32 %v1950, %v1950
        %v1983 = vmul.f32 %v1951, %v1951
        %v1984 = vmul.f32 %v1952, %v1952
        %v1985 = vmul.f32 %v1953, %v1953
        %v1986 = vmul.f32 %v1954, %v1954
        %v1987 = vmul.f32 %v1955, %v1955
        %v1988 = vmul.f32 %v1956, %v1956
        %v1989 = vmul.f32 %v1957, %v1957
        %v1990 = vmul.f32 %v1958, %v1958
        %v1991 = vmul.f32 %v1959, %v1959
        %v1992 = vmul.f32 %v1960, %v1960
        %v1993 = vmul.f32 %v1961, %v1961
        %v1994 = vmul.f32 %v1962, %v1962
        %v1995 = vsub.f32 1.0, %v1963
        %v1996 = vsub.f32 1.0, %v1964
        %v1997 = vsub.f32 1.0, %v1965
        %v1998 = vsub.f32 1.0, %v1966
        %v1999 = vsub.f32 1.0, %v1967
        %v2000 = vsub.f32 1.0, %v1968
        %v2001 = vsub.f32 1.0, %v1969
        %v2002 = vsub.f32 1.0, %v1970
        %v2003 = vsub.f32 1.0, %v1971
        %v2004 = vsub.f32 1.0, %v1972
        %v2005 = vsub.f32 1.0, %v1973
        %v2006 = vsub.f32 1.0, %v1974
        %v2007 = vsub.f32 1.0, %v1975
        %v2008 = vsub.f32 1.0, %v1976
        %v2009 = vsub.f32 1.0, %v1977
        %v2010 = vsub.f32 1.0, %v1978
        %v2011 = vsub.f32 1.0, %v1979
        %v2012 = vsub.f32 1.0, %v1980
        %v2013 = vsub.f32 1.0, %v1981
        %v2014 = vsub.f32 1.0, %v1982
        %v2015 = vsub.f32 1.0, %v1983
        %v2016 = vsub.f32 1.0, %v1984
        %v2017 = vsub.f32 1.0, %v1985
        %v2018 = vsub.f32 1.0, %v1986
        %v2019 = vsub.f32 1.0, %v1987
        %v2020 = vsub.f32 1.0, %v1988
        %v2021 = vsub.f32 1.0, %v1989
        %v2022 = vsub.f32 1.0, %v1990
        %v2023 = vsub.f32 1.0, %v1991
        %v2024 = vsub.f32 1.0, %v1992
        %v2025 = vsub.f32 1.0, %v1993
        %v2026 = vsub.f32 1.0, %v1994
        %v2027 = vmul.f32 %v1643, %v1995
        %v2028 = vmul.f32 %v1644, %v1996
        %v2029 = vmul.f32 %v1645, %v1997
        %v2030 = vmul.f32 %v1646, %v1998
        %v2031 = vmul.f32 %v1647, %v1999
        %v2032 = vmul.f32 %v1648, %v2000
        %v2033 = vmul.f32 %v1649, %v2001
        %v2034 = vmul.f32 %v1650, %v2002
        %v2035 = vmul.f32 %v1651, %v2003
        %v2036 = vmul.f32 %v1652, %v2004
        %v2037 = vmul.f32 %v1653, %v2005
        %v2038 = vmul.f32 %v1654, %v2006
        %v2039 = vmul.f32 %v1655, %v2007
        %v2040 = vmul.f32 %v1656, %v2008
        %v2041 = vmul.f32 %v1657, %v2009
        %v2042 = vmul.f32 %v1658, %v2010
        %v2043 = vmul.f32 %v1659, %v2011
        %v2044 = vmul.f32 %v1660, %v2012
        %v2045 = vmul.f32 %v1661, %v2013
        %v2046 = vmul.f32 %v1662, %v2014
        %v2047 = vmul.f32 %v1663, %v2015
        %v2048 = vmul.f32 %v1664, %v2016
        %v2049 = vmul.f32 %v1665, %v2017
        %v2050 = vmul.f32 %v1666, %v2018
        %v2051 = vmul.f32 %v1667, %v2019
        %v2052 = vmul.f32 %v1668, %v2020
        %v2053 = vmul.f32 %v1669, %v2021
        %v2054 = vmul.f32 %v1670, %v2022
        %v2055 = vmul.f32 %v1671, %v2023
        %v2056 = vmul.f32 %v1672, %v2024
        %v2057 = vmul.f32 %v1673, %v2025
        %v2058 = vmul.f32 %v1674, %v2026
        %v2059 = vadd.f32 %v1963, 1.0
        %v2060 = vadd.f32 %v1964, 1.0
        %v2061 = vadd.f32 %v1965, 1.0
        %v2062 = vadd.f32 %v1966, 1.0
        %v2063 = vadd.f32 %v1967, 1.0
        %v2064 = vadd.f32 %v1968, 1.0
        %v2065 = vadd.f32 %v1969, 1.0
        %v2066 = vadd.f32 %v1970, 1.0
        %v2067 = vadd.f32 %v1971, 1.0
        %v2068 = vadd.f32 %v1972, 1.0
        %v2069 = vadd.f32 %v1973, 1.0
        %v2070 = vadd.f32 %v1974, 1.0
        %v2071 = vadd.f32 %v1975, 1.0
        %v2072 = vadd.f32 %v1976, 1.0
        %v2073 = vadd.f32 %v1977, 1.0
        %v2074 = vadd.f32 %v1978, 1.0
        %v2075 = vadd.f32 %v1979, 1.0
        %v2076 = vadd.f32 %v1980, 1.0
        %v2077 = vadd.f32 %v1981, 1.0
        %v2078 = vadd.f32 %v1982, 1.0
        %v2079 = vadd.f32 %v1983, 1.0
        %v2080 = vadd.f32 %v1984, 1.0
        %v2081 = vadd.f32 %v1985, 1.0
        %v2082 = vadd.f32 %v1986, 1.0
        %v2083 = vadd.f32 %v1987, 1.0
        %v2084 = vadd.f32 %v1988, 1.0
        %v2085 = vadd.f32 %v1989, 1.0
        %v2086 = vadd.f32 %v1990, 1.0
        %v2087 = vadd.f32 %v1991, 1.0
        %v2088 = vadd.f32 %v1992, 1.0
        %v2089 = vadd.f32 %v1993, 1.0
        %v2090 = vadd.f32 %v1994, 1.0
        %v2091 = vrcp.pop %v2059
        %v2092 = vrcp.pop %v2060
        %v2093 = vrcp.pop %v2061
        %v2094 = vrcp.pop %v2062
        %v2095 = vrcp.pop %v2063
        %v2096 = vrcp.pop %v2064
        %v2097 = vrcp.pop %v2065
        %v2098 = vrcp.pop %v2066
        %v2099 = vrcp.pop %v2067
        %v2100 = vrcp.pop %v2068
        %v2101 = vrcp.pop %v2069
        %v2102 = vrcp.pop %v2070
        %v2103 = vrcp.pop %v2071
        %v2104 = vrcp.pop %v2072
        %v2105 = vrcp.pop %v2073
        %v2106 = vrcp.pop %v2074
        %v2107 = vrcp.pop %v2075
        %v2108 = vrcp.pop %v2076
        %v2109 = vrcp.pop %v2077
        %v2110 = vrcp.pop %v2078
        %v2111 = vrcp.pop %v2079
        %v2112 = vrcp.pop %v2080
        %v2113 = vrcp.pop %v2081
        %v2114 = vrcp.pop %v2082
        %v2115 = vrcp.pop %v2083
        %v2116 = vrcp.pop %v2084
        %v2117 = vrcp.pop %v2085
        %v2118 = vrcp.pop %v2086
        %v2119 = vrcp.pop %v2087
        %v2120 = vrcp.pop %v2088
        %v2121 = vrcp.pop %v2089
        %v2122 = vrcp.pop %v2090
        %v2123 = vmul.f32 %v2027, %v2091
        %v2124 = vmul.f32 %v2028, %v2092
        %v2125 = vmul.f32 %v2029, %v2093
        %v2126 = vmul.f32 %v2030, %v2094
        %v2127 = vmul.f32 %v2031, %v2095
        %v2128 = vmul.f32 %v2032, %v2096
        %v2129 = vmul.f32 %v2033, %v2097
        %v2130 = vmul.f32 %v2034, %v2098
        %v2131 = vmul.f32 %v2035, %v2099
        %v2132 = vmul.f32 %v2036, %v2100
        %v2133 = vmul.f32 %v2037, %v2101
        %v2134 = vmul.f32 %v2038, %v2102
        %v2135 = vmul.f32 %v2039, %v2103
        %v2136 = vmul.f32 %v2040, %v2104
        %v2137 = vmul.f32 %v2041, %v2105
        %v2138 = vmul.f32 %v2042, %v2106
        %v2139 = vmul.f32 %v2043, %v2107
        %v2140 = vmul.f32 %v2044, %v2108
        %v2141 = vmul.f32 %v2045, %v2109
        %v2142 = vmul.f32 %v2046, %v2110
        %v2143 = vmul.f32 %v2047, %v2111
        %v2144 = vmul.f32 %v2048, %v2112
        %v2145 = vmul.f32 %v2049, %v2113
        %v2146 = vmul.f32 %v2050, %v2114
        %v2147 = vmul.f32 %v2051, %v2115
        %v2148 = vmul.f32 %v2052, %v2116
        %v2149 = vmul.f32 %v2053, %v2117
        %v2150 = vmul.f32 %v2054, %v2118
        %v2151 = vmul.f32 %v2055, %v2119
        %v2152 = vmul.f32 %v2056, %v2120
        %v2153 = vmul.f32 %v2057, %v2121
        %v2154 = vmul.f32 %v2058, %v2122
        %2155 = vxpose.xlu0.b32.start [1/16] %v2123, 128
        %2156 = vxpose.xlu0.b32.cont [2/16] %v2124, 128
        %2157 = vxpose.xlu0.b32.cont [3/16] %v2125, 128
        %2158 = vxpose.xlu0.b32.cont [4/16] %v2126, 128
        %2159 = vxpose.xlu0.b32.cont [5/16] %v2127, 128
        %2160 = vxpose.xlu0.b32.cont [6/16] %v2128, 128
        %2161 = vxpose.xlu0.b32.cont [7/16] %v2129, 128
        %2162 = vxpose.xlu0.b32.cont [8/16] %v2130, 128
        %2163 = vxpose.xlu0.b32.cont [9/16] %v2131, 128
        %2164 = vxpose.xlu0.b32.cont [10/16] %v2132, 128
        %2165 = vxpose.xlu0.b32.cont [11/16] %v2133, 128
        %2166 = vxpose.xlu0.b32.cont [12/16] %v2134, 128
        %2167 = vxpose.xlu0.b32.cont [13/16] %v2135, 128
        %2168 = vxpose.xlu0.b32.cont [14/16] %v2136, 128
        %2169 = vxpose.xlu0.b32.cont [15/16] %v2137, 128
        %2170 = vxpose.xlu0.b32.end [16/16] %v2138, 128
        %v2171 = vpop.trf.xlu0
        %v2172 = vpop.trf.xlu0
        %v2173 = vpop.trf.xlu0
        %v2174 = vpop.trf.xlu0
        %v2175 = vpop.trf.xlu0
        %v2176 = vpop.trf.xlu0
        %v2177 = vpop.trf.xlu0
        %v2178 = vpop.trf.xlu0
        %v2179 = vpop.trf.xlu0
        %v2180 = vpop.trf.xlu0
        %v2181 = vpop.trf.xlu0
        %v2182 = vpop.trf.xlu0
        %v2183 = vpop.trf.xlu0
        %v2184 = vpop.trf.xlu0
        %v2185 = vpop.trf.xlu0
        %v2186 = vpop.trf.xlu0
        %2187 = vxpose.xlu0.b32.start [1/16] %v2139, 128
        %2188 = vxpose.xlu0.b32.cont [2/16] %v2140, 128
        %2189 = vxpose.xlu0.b32.cont [3/16] %v2141, 128
        %2190 = vxpose.xlu0.b32.cont [4/16] %v2142, 128
        %2191 = vxpose.xlu0.b32.cont [5/16] %v2143, 128
        %2192 = vxpose.xlu0.b32.cont [6/16] %v2144, 128
        %2193 = vxpose.xlu0.b32.cont [7/16] %v2145, 128
        %2194 = vxpose.xlu0.b32.cont [8/16] %v2146, 128
        %2195 = vxpose.xlu0.b32.cont [9/16] %v2147, 128
        %2196 = vxpose.xlu0.b32.cont [10/16] %v2148, 128
        %2197 = vxpose.xlu0.b32.cont [11/16] %v2149, 128
        %2198 = vxpose.xlu0.b32.cont [12/16] %v2150, 128
        %2199 = vxpose.xlu0.b32.cont [13/16] %v2151, 128
        %2200 = vxpose.xlu0.b32.cont [14/16] %v2152, 128
        %2201 = vxpose.xlu0.b32.cont [15/16] %v2153, 128
        %2202 = vxpose.xlu0.b32.end [16/16] %v2154, 128
        %v2203 = vpop.trf.xlu0
        %v2204 = vpop.trf.xlu0
        %v2205 = vpop.trf.xlu0
        %v2206 = vpop.trf.xlu0
        %v2207 = vpop.trf.xlu0
        %v2208 = vpop.trf.xlu0
        %v2209 = vpop.trf.xlu0
        %v2210 = vpop.trf.xlu0
        %v2211 = vpop.trf.xlu0
        %v2212 = vpop.trf.xlu0
        %v2213 = vpop.trf.xlu0
        %v2214 = vpop.trf.xlu0
        %v2215 = vpop.trf.xlu0
        %v2216 = vpop.trf.xlu0
        %v2217 = vpop.trf.xlu0
        %v2218 = vpop.trf.xlu0
        %2219 = vst [vmem:[%s290] sm:$0xff] %v2171
        %2220 = vst [vmem:[%s290 + $0x8] sm:$0xff] %v2203
        %2221 = vst [vmem:[%s290 + $0x10] sm:$0xff] %v2172
        %2222 = vst [vmem:[%s290 + $0x18] sm:$0xff] %v2204
        %2223 = vst [vmem:[%s290 + $0x20] sm:$0xff] %v2173
        %2224 = vst [vmem:[%s290 + $0x28] sm:$0xff] %v2205
        %2225 = vst [vmem:[%s290 + $0x30] sm:$0xff] %v2174
        %2226 = vst [vmem:[%s290 + $0x38] sm:$0xff] %v2206
        %2227 = vst [vmem:[%s290 + $0x40] sm:$0xff] %v2175
        %2228 = vst [vmem:[%s290 + $0x48] sm:$0xff] %v2207
        %2229 = vst [vmem:[%s290 + $0x50] sm:$0xff] %v2176
        %2230 = vst [vmem:[%s290 + $0x58] sm:$0xff] %v2208
        %2231 = vst [vmem:[%s290 + $0x60] sm:$0xff] %v2177
        %2232 = vst [vmem:[%s290 + $0x68] sm:$0xff] %v2209
        %2233 = vst [vmem:[%s290 + $0x70] sm:$0xff] %v2178
        %2234 = vst [vmem:[%s290 + $0x78] sm:$0xff] %v2210
        %2235 = vst [vmem:[%s290 + $0x80] sm:$0xff] %v2179
        %2236 = vst [vmem:[%s290 + $0x88] sm:$0xff] %v2211
        %2237 = vst [vmem:[%s290 + $0x90] sm:$0xff] %v2180
        %2238 = vst [vmem:[%s290 + $0x98] sm:$0xff] %v2212
        %2239 = vst [vmem:[%s290 + $0xa0] sm:$0xff] %v2181
        %2240 = vst [vmem:[%s290 + $0xa8] sm:$0xff] %v2213
        %2241 = vst [vmem:[%s290 + $0xb0] sm:$0xff] %v2182
        %2242 = vst [vmem:[%s290 + $0xb8] sm:$0xff] %v2214
        %2243 = vst [vmem:[%s290 + $0xc0] sm:$0xff] %v2183
        %2244 = vst [vmem:[%s290 + $0xc8] sm:$0xff] %v2215
        %2245 = vst [vmem:[%s290 + $0xd0] sm:$0xff] %v2184
        %2246 = vst [vmem:[%s290 + $0xd8] sm:$0xff] %v2216
        %2247 = vst [vmem:[%s290 + $0xe0] sm:$0xff] %v2185
        %2248 = vst [vmem:[%s290 + $0xe8] sm:$0xff] %v2217
        %2249 = vst [vmem:[%s290 + $0xf0] sm:$0xff] %v2186
        %2250 = vst [vmem:[%s290 + $0xf8] sm:$0xff] %v2218
        %s2251 = sand.u32 %s166, 1
        %s2252 = scalar_lea.sflag [#allocation3], %s2251
        %s2253 = sand.u32 %s166, 1
        %s2254 = smul.addr %s2253, 256
        %s2255 = scalar_lea.vmem [#allocation2], %s2254
        // Predicated region
        $region37: #{tpu_custom_call.1} parent=35 // pred_check
          %p2256 = pneg %p176
        $region38: #{tpu_custom_call.1} parent=35 // pred_check_branch
          %2258 = sbr.rel (%p2256) target = $region40
        $region39: #{tpu_custom_call.1} parent=35 // pred_region
          %s2259 = smul.u32 16, %s26
          %s2260 = smul.u32 2, %s25
          %2262 = vsyncadd %s2252, 0
          %s2263 = smul.addr %s2259, 2
          %s2264 = sadd.s32 %s2260, %s2263
          %s2265 = smul.addr %s24, 32
          %s2266 = sadd.s32 %s2264, %s2265
          %s2267 = smul.addr %s2266, 8
          %s2268 = scalar_lea.hbm %s4, %s2267
          %s2269 = sshll.u32 %s2255, 4
          %s2270 = int_to_ptr.vmem [resolvable:$true] %s2269
          %s2271 = sshll.u32 %s2268, 4
          %s2272 = int_to_ptr.hbm [resolvable:$true] %s2271
          %2277 = dma.vmem_to_hbm [thread:$0]  %s2270, 4096, %s2272, %s2252, 256, 256, 16
        $region40: #{tpu_custom_call.1} parent=35 // pred_fallthru
          _
      $region36: #{tpu_custom_call.1} parent=5 // pred_fallthru
        _
      %p2278 = scmp.le.s32.totalorder 2, %s13
      // Predicated region
      $region41: #{tpu_custom_call.1} parent=5 // pred_check
        %p2279 = pneg %p2278
      $region42: #{tpu_custom_call.1} parent=5 // pred_check_branch
        %2281 = sbr.rel (%p2279) target = $region44
      $region43: #{tpu_custom_call.1} parent=5 // pred_region
        %s2282 = ssub.s32 %s13, 2
        // Predicated region
        $region45: #{tpu_custom_call.1} parent=43 // pred_check
          %p2283 = pneg %p182
        $region46: #{tpu_custom_call.1} parent=43 // pred_check_branch
          %2285 = sbr.rel (%p2283) target = $region48
        $region47: #{tpu_custom_call.1} parent=43 // pred_region
          %s2286 = sand.u32 %s167, 1
          %s2287 = scalar_lea.sflag [#allocation3], %s2286
          %s2288 = sand.u32 %s167, 1
          %s2289 = smul.addr %s2288, 256
          %s2290 = scalar_lea.vmem [#allocation2], %s2289
          %2292 = dma.done %s2287, 4096
        $region48: #{tpu_custom_call.1} parent=43 // pred_fallthru
          _
      $region44: #{tpu_custom_call.1} parent=5 // pred_fallthru
        _
    $region6: #{tpu_custom_call.1} parent=1 // loop_footer
      %s17 = sadd.s32 1, %s13
    $region7: #{tpu_custom_call.1} parent=1 // loop_footer_branch
      %12 = sbr.rel target = $region3
    $region8: #{tpu_custom_call.1} parent=1 // loop_exit
      _
    %2293 = vsyncpa [#allocation3], 1
    %s2294 = scalar_lea.sflag [#allocation3], 1
    %2295 = vsyncpa %s2294, 1

</llo_original>
